<compile_context>
chip_gen: v7x
topology: tpu7x:2x2x1
jax: 0.10.0
libtpu: 0.0.40
codegen_flags: <defaults>
</compile_context>

<pallas_src>
import jax
import jax.numpy as jnp
from jax.experimental import pallas as pl
from jax.experimental.pallas import tpu as pltpu

INPUT_DIM = 5
SCENARIO_COUNT = 275
EMBED_DIM = 8
HIDDEN = 128
CAT_DIM = INPUT_DIM + EMBED_DIM          # 13
CAT_PAD = 16                             # padded contraction dim (zero rows in W_in)
TM_MAX = 2048                            # batch tile (rows per grid step)


def _round_up(n, m):
    return ((n + m - 1) // m) * m


def _mlp_kernel(x_ref, win_ref, wblk_ref, bias_ref, wout_ref, bout_ref, o_ref):
    """Transposed formulation: activations are (HIDDEN, tm), lane-dense.

    x_ref    : (16, tm)       bf16   input tile (xcat^T, zero-padded 13 -> 16)
    win_ref  : (128, 16)      bf16   W_in^T (padded)
    wblk_ref : (6, 128, 128)  bf16   [W1a^T, W2a^T, W1b^T, W2b^T, W1c^T, W2c^T]
    bias_ref : (7, 128, 1)    f32    [b_in, b1a, b2a, b1b, b2b, b1c, b2c]
    wout_ref : (128, 1)       f32    output weight column
    bout_ref : (1, 1)         f32    output bias
    o_ref    : (1, tm)        f32    lane-dense output row
    """
    bf16 = jnp.bfloat16

    # input projection: (128,16)bf16 @ (16,tm)bf16 -> f32, + (128,1) bias
    h = jnp.dot(win_ref[...], x_ref[...],
                preferred_element_type=jnp.float32) + bias_ref[0]

    def resblock(h, k):
        # bf16 operands on the MXU, f32 accumulation; elementwise work in f32.
        t = jnp.dot(wblk_ref[2 * k], h.astype(bf16),
                    preferred_element_type=jnp.float32) + bias_ref[2 * k + 1]
        t = jnp.maximum(t, 0.0)                               # ReLU inside block
        t = jnp.dot(wblk_ref[2 * k + 1], t.astype(bf16),
                    preferred_element_type=jnp.float32) + bias_ref[2 * k + 2]
        return jnp.maximum(h + t, 0.0)                        # relu(x + block(x))

    h = resblock(h, 0)
    h = resblock(h, 1)
    h = resblock(h, 2)

    # output head on VPU/XLU (frees the MXU): sublane reduction -> lane-dense (1, tm).
    o_ref[...] = (jnp.sum(h * wout_ref[...], axis=0, keepdims=True)
                  + bout_ref[...])


def init_params(key):
    """Deterministic synthetic parameters (shapes match the PyTorch module)."""
    ks = jax.random.split(key, 17)

    def lin(kw, kb, fan_in, fan_out):
        bound = 1.0 / jnp.sqrt(float(fan_in))
        w = jax.random.uniform(kw, (fan_in, fan_out), jnp.float32, -bound, bound)
        b = jax.random.uniform(kb, (1, fan_out), jnp.float32, -bound, bound)
        return w, b

    params = {}
    params["embed"] = jax.random.normal(ks[0], (SCENARIO_COUNT, EMBED_DIM),
                                        jnp.float32)
    params["win"], params["bin"] = lin(ks[1], ks[2], CAT_DIM, HIDDEN)
    blocks = []
    for i in range(3):
        w1, b1 = lin(ks[3 + 4 * i], ks[4 + 4 * i], HIDDEN, HIDDEN)
        w2, b2 = lin(ks[5 + 4 * i], ks[6 + 4 * i], HIDDEN, HIDDEN)
        blocks.append((w1, b1, w2, b2))
    params["blocks"] = blocks
    params["wout"], params["bout"] = lin(ks[15], ks[16], HIDDEN, 1)
    return params


def context_aware_mlp(x, sid, params):
    """x: (B, 5) float32, sid: (B,) int32 -> (B, 1) float32."""
    B = x.shape[0]
    bf16 = jnp.bfloat16

    # --- JAX glue: embedding gather, concat (transposed), zero-pad 13 -> 16 ---
    s_embed = jnp.take(params["embed"], sid, axis=0)              # (B, 8)
    xcat_t = jnp.concatenate([x.T, s_embed.T], axis=0)            # (13, B)
    xcat_t = jnp.pad(xcat_t, ((0, CAT_PAD - CAT_DIM), (0, 0)))    # (16, B)

    # Batch tile: multiple of 128 (lane-dense), capped at TM_MAX, and capped at ~B/2
    # when B > 128 so v7x's two TensorCores both get grid steps.
    tm = min(TM_MAX, _round_up(max(B, 1), 128))
    if B > 128:
        tm = min(tm, _round_up(-(-B // 2), 128))
    Bp = _round_up(B, tm)
    if Bp != B:
        xcat_t = jnp.pad(xcat_t, ((0, 0), (0, Bp - B)))
    xcat_t = xcat_t.astype(bf16)                                  # bf16 in the wrapper

    # Packed, VMEM-resident parameters (transposed so activations are (128, tm)).
    win_t = jnp.pad(params["win"],
                    ((0, CAT_PAD - CAT_DIM), (0, 0))).T.astype(bf16)          # (128, 16)
    wblk = jnp.stack([w.T for blk in params["blocks"]
                      for w in (blk[0], blk[2])]).astype(bf16)                # (6,128,128)
    biases = jnp.stack([params["bin"].reshape(HIDDEN, 1)]
                       + [b.reshape(HIDDEN, 1) for blk in params["blocks"]
                          for b in (blk[1], blk[3])])                         # (7,128,1)
    wout = params["wout"]                                                     # (128, 1)
    bout = params["bout"].reshape(1, 1)                                       # (1, 1)

    def resident(shape):
        # full-shape block, constant index_map -> loaded once, stays VMEM-resident
        return pl.BlockSpec(shape, lambda i, _n=len(shape): (0,) * _n)

    out = pl.pallas_call(
        _mlp_kernel,
        out_shape=jax.ShapeDtypeStruct((1, Bp), jnp.float32),
        grid=(Bp // tm,),
        in_specs=[
            pl.BlockSpec((CAT_PAD, tm), lambda i: (0, i)),        # lane-dense input tile
            resident(win_t.shape),
            resident(wblk.shape),
            resident(biases.shape),
            resident(wout.shape),
            resident(bout.shape),
        ],
        out_specs=pl.BlockSpec((1, tm), lambda i: (0, i)),        # lane-dense output row
        compiler_params=pltpu.CompilerParams(
            dimension_semantics=("parallel",)),                   # v7x: shard over 2 TCs
    )(xcat_t, win_t, wblk, biases, wout, bout)

    return out.reshape(Bp, 1)[:B]


def reference_forward_f32(x, sid, params):
    """Pure-f32 JAX reference matching the PyTorch forward semantics."""
    s_embed = jnp.take(params["embed"], sid, axis=0)
    h = jnp.concatenate([x, s_embed], axis=1)
    h = h @ params["win"] + params["bin"]
    for (w1, b1, w2, b2) in params["blocks"]:
        t = jnp.maximum(h @ w1 + b1, 0.0)
        t = t @ w2 + b2
        h = jnp.maximum(h + t, 0.0)
    return h @ params["wout"] + params["bout"]


def reference_forward_mixed(x, sid, params):
    """Mixed-precision reference mirroring the kernel's bf16-operand / f32-accum math."""
    bf16 = jnp.bfloat16
    s_embed = jnp.take(params["embed"], sid, axis=0)
    h = jnp.concatenate([x, s_embed], axis=1)
    h = jnp.dot(h.astype(bf16), params["win"].astype(bf16),
                preferred_element_type=jnp.float32) + params["bin"]
    for (w1, b1, w2, b2) in params["blocks"]:
        t = jnp.dot(h.astype(bf16), w1.astype(bf16),
                    preferred_element_type=jnp.float32) + b1
        t = jnp.maximum(t, 0.0)
        t = jnp.dot(t.astype(bf16), w2.astype(bf16),
                    preferred_element_type=jnp.float32) + b2
        h = jnp.maximum(h + t, 0.0)
    return h @ params["wout"] + params["bout"]


if __name__ == "__main__":
    key = jax.random.PRNGKey(0)
    k_params, k_x, k_sid = jax.random.split(key, 3)

    params = init_params(k_params)

    B = 8
    x = jax.random.normal(k_x, (B, INPUT_DIM), jnp.float32)
    sid = jax.random.randint(k_sid, (B,), 0, SCENARIO_COUNT, jnp.int32)

    out = context_aware_mlp(x, sid, params)
    out = jax.block_until_ready(out)
    assert out.shape == (B, 1), out.shape

    # Tight check against a reference that uses the same bf16-operand math.
    ref_mixed = reference_forward_mixed(x, sid, params)
    assert jnp.allclose(out, ref_mixed, atol=1e-3, rtol=1e-3), (out, ref_mixed)

    # Loose sanity check against the full-f32 PyTorch-equivalent reference.
    ref_f32 = reference_forward_f32(x, sid, params)
    assert jnp.allclose(out, ref_f32, atol=1e-1, rtol=1e-1), (out, ref_f32)

    print("KERNEL_OK")
</pallas_src>

<mosaic_0001>
module attributes {stable_mosaic.version = 11 : i64} {
  func.func @_mlp_kernel(%arg0: i32, %arg1: memref<16x128xbf16, #tpu.memory_space<vmem>>, %arg2: memref<128x16xbf16, #tpu.memory_space<vmem>>, %arg3: memref<6x128x128xbf16, #tpu.memory_space<vmem>>, %arg4: memref<7x128x1xf32, #tpu.memory_space<vmem>>, %arg5: memref<128x1xf32, #tpu.memory_space<vmem>>, %arg6: memref<1x1xf32, #tpu.memory_space<vmem>>, %arg7: memref<1x128xf32, #tpu.memory_space<vmem>>) attributes {dimension_semantics = [#tpu.dimension_semantics<parallel>], iteration_bounds = array<i64: 1>, scalar_prefetch = 0 : i64, scratch_operands = 0 : i64, tpu.core_type = #tpu.core_type<tc>, window_params = [{transform_indices = @transform_0, window_bounds = array<i64: 16, 128>}, {pipeline_mode = #tpu.pipeline_mode<synchronous>, transform_indices = @transform_1, window_bounds = array<i64: 128, 16>}, {pipeline_mode = #tpu.pipeline_mode<synchronous>, transform_indices = @transform_2, window_bounds = array<i64: 6, 128, 128>}, {pipeline_mode = #tpu.pipeline_mode<synchronous>, transform_indices = @transform_3, window_bounds = array<i64: 7, 128, 1>}, {pipeline_mode = #tpu.pipeline_mode<synchronous>, transform_indices = @transform_4, window_bounds = array<i64: 128, 1>}, {pipeline_mode = #tpu.pipeline_mode<synchronous>, transform_indices = @transform_5, window_bounds = array<i64: 1, 1>}, {transform_indices = @transform_6, window_bounds = array<i64: 1, 128>}]} {
    %c0 = arith.constant 0 : index
    %c0_0 = arith.constant 0 : index
    %0 = vector.load %arg2[%c0, %c0_0] : memref<128x16xbf16, #tpu.memory_space<vmem>>, vector<128x16xbf16>
    %c0_1 = arith.constant 0 : index
    %c0_2 = arith.constant 0 : index
    %1 = vector.load %arg1[%c0_1, %c0_2] : memref<16x128xbf16, #tpu.memory_space<vmem>>, vector<16x128xbf16>
    %cst = arith.constant dense<0.000000e+00> : vector<128x128xf32>
    %2 = tpu.matmul %0, %1, %cst {dimension_numbers = #tpu.dot_dimension_numbers<[1], [0], [0], [1], [0, 0, 1, 1], [], []>} : vector<128x16xbf16>, vector<16x128xbf16>, vector<128x128xf32> -> vector<128x128xf32>
    %c0_3 = arith.constant 0 : index
    %c0_4 = arith.constant 0 : index
    %c0_5 = arith.constant 0 : index
    %3 = vector.load %arg4[%c0_3, %c0_4, %c0_5] : memref<7x128x1xf32, #tpu.memory_space<vmem>>, vector<1x128x1xf32>
    %4 = vector.shape_cast %3 : vector<1x128x1xf32> to vector<128x1xf32>
    %5 = vector.broadcast %4 : vector<128x1xf32> to vector<128x128xf32>
    %6 = arith.addf %2, %5 : vector<128x128xf32>
    %c0_6 = arith.constant 0 : index
    %c0_7 = arith.constant 0 : index
    %c0_8 = arith.constant 0 : index
    %7 = vector.load %arg3[%c0_6, %c0_7, %c0_8] : memref<6x128x128xbf16, #tpu.memory_space<vmem>>, vector<1x128x128xbf16>
    %8 = vector.shape_cast %7 : vector<1x128x128xbf16> to vector<128x128xbf16>
    %9 = arith.truncf %6 : vector<128x128xf32> to vector<128x128xbf16>
    %cst_9 = arith.constant dense<0.000000e+00> : vector<128x128xf32>
    %10 = tpu.matmul %8, %9, %cst_9 {dimension_numbers = #tpu.dot_dimension_numbers<[1], [0], [0], [1], [0, 0, 1, 1], [], []>} : vector<128x128xbf16>, vector<128x128xbf16>, vector<128x128xf32> -> vector<128x128xf32>
    %c1 = arith.constant 1 : index
    %c0_10 = arith.constant 0 : index
    %c0_11 = arith.constant 0 : index
    %11 = vector.load %arg4[%c1, %c0_10, %c0_11] : memref<7x128x1xf32, #tpu.memory_space<vmem>>, vector<1x128x1xf32>
    %12 = vector.shape_cast %11 : vector<1x128x1xf32> to vector<128x1xf32>
    %13 = vector.broadcast %12 : vector<128x1xf32> to vector<128x128xf32>
    %14 = arith.addf %10, %13 : vector<128x128xf32>
    %cst_12 = arith.constant 0.000000e+00 : f32
    %15 = vector.broadcast %cst_12 : f32 to vector<128x128xf32>
    %16 = arith.maximumf %14, %15 : vector<128x128xf32>
    %c1_13 = arith.constant 1 : index
    %c0_14 = arith.constant 0 : index
    %c0_15 = arith.constant 0 : index
    %17 = vector.load %arg3[%c1_13, %c0_14, %c0_15] : memref<6x128x128xbf16, #tpu.memory_space<vmem>>, vector<1x128x128xbf16>
    %18 = vector.shape_cast %17 : vector<1x128x128xbf16> to vector<128x128xbf16>
    %19 = arith.truncf %16 : vector<128x128xf32> to vector<128x128xbf16>
    %cst_16 = arith.constant dense<0.000000e+00> : vector<128x128xf32>
    %20 = tpu.matmul %18, %19, %cst_16 {dimension_numbers = #tpu.dot_dimension_numbers<[1], [0], [0], [1], [0, 0, 1, 1], [], []>} : vector<128x128xbf16>, vector<128x128xbf16>, vector<128x128xf32> -> vector<128x128xf32>
    %c2 = arith.constant 2 : index
    %c0_17 = arith.constant 0 : index
    %c0_18 = arith.constant 0 : index
    %21 = vector.load %arg4[%c2, %c0_17, %c0_18] : memref<7x128x1xf32, #tpu.memory_space<vmem>>, vector<1x128x1xf32>
    %22 = vector.shape_cast %21 : vector<1x128x1xf32> to vector<128x1xf32>
    %23 = vector.broadcast %22 : vector<128x1xf32> to vector<128x128xf32>
    %24 = arith.addf %20, %23 : vector<128x128xf32>
    %25 = arith.addf %6, %24 : vector<128x128xf32>
    %cst_19 = arith.constant 0.000000e+00 : f32
    %26 = vector.broadcast %cst_19 : f32 to vector<128x128xf32>
    %27 = arith.maximumf %25, %26 : vector<128x128xf32>
    %c2_20 = arith.constant 2 : index
    %c0_21 = arith.constant 0 : index
    %c0_22 = arith.constant 0 : index
    %28 = vector.load %arg3[%c2_20, %c0_21, %c0_22] : memref<6x128x128xbf16, #tpu.memory_space<vmem>>, vector<1x128x128xbf16>
    %29 = vector.shape_cast %28 : vector<1x128x128xbf16> to vector<128x128xbf16>
    %30 = arith.truncf %27 : vector<128x128xf32> to vector<128x128xbf16>
    %cst_23 = arith.constant dense<0.000000e+00> : vector<128x128xf32>
    %31 = tpu.matmul %29, %30, %cst_23 {dimension_numbers = #tpu.dot_dimension_numbers<[1], [0], [0], [1], [0, 0, 1, 1], [], []>} : vector<128x128xbf16>, vector<128x128xbf16>, vector<128x128xf32> -> vector<128x128xf32>
    %c3 = arith.constant 3 : index
    %c0_24 = arith.constant 0 : index
    %c0_25 = arith.constant 0 : index
    %32 = vector.load %arg4[%c3, %c0_24, %c0_25] : memref<7x128x1xf32, #tpu.memory_space<vmem>>, vector<1x128x1xf32>
    %33 = vector.shape_cast %32 : vector<1x128x1xf32> to vector<128x1xf32>
    %34 = vector.broadcast %33 : vector<128x1xf32> to vector<128x128xf32>
    %35 = arith.addf %31, %34 : vector<128x128xf32>
    %cst_26 = arith.constant 0.000000e+00 : f32
    %36 = vector.broadcast %cst_26 : f32 to vector<128x128xf32>
    %37 = arith.maximumf %35, %36 : vector<128x128xf32>
    %c3_27 = arith.constant 3 : index
    %c0_28 = arith.constant 0 : index
    %c0_29 = arith.constant 0 : index
    %38 = vector.load %arg3[%c3_27, %c0_28, %c0_29] : memref<6x128x128xbf16, #tpu.memory_space<vmem>>, vector<1x128x128xbf16>
    %39 = vector.shape_cast %38 : vector<1x128x128xbf16> to vector<128x128xbf16>
    %40 = arith.truncf %37 : vector<128x128xf32> to vector<128x128xbf16>
    %cst_30 = arith.constant dense<0.000000e+00> : vector<128x128xf32>
    %41 = tpu.matmul %39, %40, %cst_30 {dimension_numbers = #tpu.dot_dimension_numbers<[1], [0], [0], [1], [0, 0, 1, 1], [], []>} : vector<128x128xbf16>, vector<128x128xbf16>, vector<128x128xf32> -> vector<128x128xf32>
    %c4 = arith.constant 4 : index
    %c0_31 = arith.constant 0 : index
    %c0_32 = arith.constant 0 : index
    %42 = vector.load %arg4[%c4, %c0_31, %c0_32] : memref<7x128x1xf32, #tpu.memory_space<vmem>>, vector<1x128x1xf32>
    %43 = vector.shape_cast %42 : vector<1x128x1xf32> to vector<128x1xf32>
    %44 = vector.broadcast %43 : vector<128x1xf32> to vector<128x128xf32>
    %45 = arith.addf %41, %44 : vector<128x128xf32>
    %46 = arith.addf %27, %45 : vector<128x128xf32>
    %cst_33 = arith.constant 0.000000e+00 : f32
    %47 = vector.broadcast %cst_33 : f32 to vector<128x128xf32>
    %48 = arith.maximumf %46, %47 : vector<128x128xf32>
    %c4_34 = arith.constant 4 : index
    %c0_35 = arith.constant 0 : index
    %c0_36 = arith.constant 0 : index
    %49 = vector.load %arg3[%c4_34, %c0_35, %c0_36] : memref<6x128x128xbf16, #tpu.memory_space<vmem>>, vector<1x128x128xbf16>
    %50 = vector.shape_cast %49 : vector<1x128x128xbf16> to vector<128x128xbf16>
    %51 = arith.truncf %48 : vector<128x128xf32> to vector<128x128xbf16>
    %cst_37 = arith.constant dense<0.000000e+00> : vector<128x128xf32>
    %52 = tpu.matmul %50, %51, %cst_37 {dimension_numbers = #tpu.dot_dimension_numbers<[1], [0], [0], [1], [0, 0, 1, 1], [], []>} : vector<128x128xbf16>, vector<128x128xbf16>, vector<128x128xf32> -> vector<128x128xf32>
    %c5 = arith.constant 5 : index
    %c0_38 = arith.constant 0 : index
    %c0_39 = arith.constant 0 : index
    %53 = vector.load %arg4[%c5, %c0_38, %c0_39] : memref<7x128x1xf32, #tpu.memory_space<vmem>>, vector<1x128x1xf32>
    %54 = vector.shape_cast %53 : vector<1x128x1xf32> to vector<128x1xf32>
    %55 = vector.broadcast %54 : vector<128x1xf32> to vector<128x128xf32>
    %56 = arith.addf %52, %55 : vector<128x128xf32>
    %cst_40 = arith.constant 0.000000e+00 : f32
    %57 = vector.broadcast %cst_40 : f32 to vector<128x128xf32>
    %58 = arith.maximumf %56, %57 : vector<128x128xf32>
    %c5_41 = arith.constant 5 : index
    %c0_42 = arith.constant 0 : index
    %c0_43 = arith.constant 0 : index
    %59 = vector.load %arg3[%c5_41, %c0_42, %c0_43] : memref<6x128x128xbf16, #tpu.memory_space<vmem>>, vector<1x128x128xbf16>
    %60 = vector.shape_cast %59 : vector<1x128x128xbf16> to vector<128x128xbf16>
    %61 = arith.truncf %58 : vector<128x128xf32> to vector<128x128xbf16>
    %cst_44 = arith.constant dense<0.000000e+00> : vector<128x128xf32>
    %62 = tpu.matmul %60, %61, %cst_44 {dimension_numbers = #tpu.dot_dimension_numbers<[1], [0], [0], [1], [0, 0, 1, 1], [], []>} : vector<128x128xbf16>, vector<128x128xbf16>, vector<128x128xf32> -> vector<128x128xf32>
    %c6 = arith.constant 6 : index
    %c0_45 = arith.constant 0 : index
    %c0_46 = arith.constant 0 : index
    %63 = vector.load %arg4[%c6, %c0_45, %c0_46] : memref<7x128x1xf32, #tpu.memory_space<vmem>>, vector<1x128x1xf32>
    %64 = vector.shape_cast %63 : vector<1x128x1xf32> to vector<128x1xf32>
    %65 = vector.broadcast %64 : vector<128x1xf32> to vector<128x128xf32>
    %66 = arith.addf %62, %65 : vector<128x128xf32>
    %67 = arith.addf %48, %66 : vector<128x128xf32>
    %cst_47 = arith.constant 0.000000e+00 : f32
    %68 = vector.broadcast %cst_47 : f32 to vector<128x128xf32>
    %69 = arith.maximumf %67, %68 : vector<128x128xf32>
    %c0_48 = arith.constant 0 : index
    %c0_49 = arith.constant 0 : index
    %70 = vector.load %arg5[%c0_48, %c0_49] : memref<128x1xf32, #tpu.memory_space<vmem>>, vector<128x1xf32>
    %71 = vector.broadcast %70 : vector<128x1xf32> to vector<128x128xf32>
    %72 = arith.mulf %69, %71 : vector<128x128xf32>
    %cst_50 = arith.constant dense<0.000000e+00> : vector<128xf32>
    %73 = vector.multi_reduction <add>, %72, %cst_50 [0] : vector<128x128xf32> to vector<128xf32>
    %74 = vector.shape_cast %73 : vector<128xf32> to vector<1x128xf32>
    %c0_51 = arith.constant 0 : index
    %c0_52 = arith.constant 0 : index
    %75 = vector.load %arg6[%c0_51, %c0_52] : memref<1x1xf32, #tpu.memory_space<vmem>>, vector<1x1xf32>
    %76 = vector.broadcast %75 : vector<1x1xf32> to vector<1x128xf32>
    %77 = arith.addf %74, %76 : vector<1x128xf32>
    %c0_53 = arith.constant 0 : index
    %c0_54 = arith.constant 0 : index
    %78 = vector.load %arg7[%c0_53, %c0_54] : memref<1x128xf32, #tpu.memory_space<vmem>>, vector<1x128xf32>
    tpu.vector_store %arg7[%c0_53, %c0_54], %77 {strides = array<i32>} : memref<1x128xf32, #tpu.memory_space<vmem>>, vector<1x128xf32>,
    return
  }
  func.func @transform_0(%arg0: i32) -> (i32, i32) {
    %c0_i32 = arith.constant 0 : i32
    %c0_i32_0 = arith.constant 0 : i32
    return %c0_i32, %arg0 : i32, i32
  }
  func.func @transform_1(%arg0: i32) -> (i32, i32) {
    %c0_i32 = arith.constant 0 : i32
    %c0_i32_0 = arith.constant 0 : i32
    %c0_i32_1 = arith.constant 0 : i32
    return %c0_i32, %c0_i32_0 : i32, i32
  }
  func.func @transform_2(%arg0: i32) -> (i32, i32, i32) {
    %c0_i32 = arith.constant 0 : i32
    %c0_i32_0 = arith.constant 0 : i32
    %c0_i32_1 = arith.constant 0 : i32
    %c0_i32_2 = arith.constant 0 : i32
    return %c0_i32, %c0_i32_0, %c0_i32_1 : i32, i32, i32
  }
  func.func @transform_3(%arg0: i32) -> (i32, i32, i32) {
    %c0_i32 = arith.constant 0 : i32
    %c0_i32_0 = arith.constant 0 : i32
    %c0_i32_1 = arith.constant 0 : i32
    %c0_i32_2 = arith.constant 0 : i32
    return %c0_i32, %c0_i32_0, %c0_i32_1 : i32, i32, i32
  }
  func.func @transform_4(%arg0: i32) -> (i32, i32) {
    %c0_i32 = arith.constant 0 : i32
    %c0_i32_0 = arith.constant 0 : i32
    %c0_i32_1 = arith.constant 0 : i32
    return %c0_i32, %c0_i32_0 : i32, i32
  }
  func.func @transform_5(%arg0: i32) -> (i32, i32) {
    %c0_i32 = arith.constant 0 : i32
    %c0_i32_0 = arith.constant 0 : i32
    %c0_i32_1 = arith.constant 0 : i32
    return %c0_i32, %c0_i32_0 : i32, i32
  }
  func.func @transform_6(%arg0: i32) -> (i32, i32) {
    %c0_i32 = arith.constant 0 : i32
    %c0_i32_0 = arith.constant 0 : i32
    return %c0_i32, %arg0 : i32, i32
  }
}

</mosaic_0001>

<llo_original>
// kernel: tpu_custom_call.1
$region0: #{tpu_custom_call.1}
  #allocation0 [shape = 'u32[]', space=smem, size = 0x4, offset = 0x4, fixed_abs, tag = 'smem constant byte address 0x4 - core index']
  #allocation1 [shape = 'u32[144,128]{1,0:T(1,128)}', space=vmem, size = 0x12000, scoped, tag = 'internal scratch']
  #allocation2 [shape = 'f32[1,1]{1,0:T(1,128)S(1)}', space=vmem, size = 0x200, scoped, tag = 'scoped memory for tpu_custom_call.1']
  %s0 = inlined_call_operand.vmem [shape: bf16[16,128], index: 0, kind: input, shape index: {}]
  %s1 = inlined_call_operand.vmem [shape: bf16[128,16], index: 1, kind: input, shape index: {}]
  %s2 = inlined_call_operand.vmem [shape: bf16[6,128,128], index: 2, kind: input, shape index: {}]
  %s3 = inlined_call_operand.vmem [shape: f32[7,128,1], index: 3, kind: input, shape index: {}]
  %s4 = inlined_call_operand.vmem [shape: f32[128,1], index: 4, kind: input, shape index: {}]
  %s5 = inlined_call_operand.<no memory space> [shape: f32[1,1], index: 5, kind: input, shape index: {}]
  %s6 = inlined_call_operand.hbm [shape: f32[1,128], index: 6, kind: output, shape index: {}]
  %s7 = sld [smem:[#allocation0]]
  $region34: #{tpu_custom_call.1} parent=0
    _
  %s9 = ssub.s32 1, %s7
  %s10 = scalar_select 0, %s9, %s7
  %v11 = vstv %s5
  %12 = vst [vmem:[#allocation2] sm:$0x1] %v11
  $region1: #{tpu_custom_call.1} parent=0
    #allocation3 [shape = 'u8[512]{0}', space=vmem, size = 0x400, scoped, tag = 'output window, operand 0, single buffered']
    #allocation4 [shape = 's32[1]{0}', space=sflag, size = 0x4, scoped, tag = 'scoped memory for tpu_custom_call.1']
    %13 = vsyncpa [#allocation4], 0
    // Predicated region
    $region2: #{tpu_custom_call.1} parent=1 // pred_check
      _
    $region3: #{tpu_custom_call.1} parent=1 // pred_check_branch
      %15 = sbr.rel (0) target = $region5
    $region4: #{tpu_custom_call.1} parent=1 // pred_region
      _
    $region5: #{tpu_custom_call.1} parent=1 // pred_fallthru
      _
    // Predicated region
    $region6: #{tpu_custom_call.1} parent=1 // pred_check
      _
    $region7: #{tpu_custom_call.1} parent=1 // pred_check_branch
      %17 = sbr.rel (0) target = $region9
    $region8: #{tpu_custom_call.1} parent=1 // pred_region
      _
    $region9: #{tpu_custom_call.1} parent=1 // pred_fallthru
      _
    // Predicated region
    $region10: #{tpu_custom_call.1} parent=1 // pred_check
      _
    $region11: #{tpu_custom_call.1} parent=1 // pred_check_branch
      %19 = sbr.rel (0) target = $region13
    $region12: #{tpu_custom_call.1} parent=1 // pred_region
      _
    $region13: #{tpu_custom_call.1} parent=1 // pred_fallthru
      _
    // Predicated region
    $region14: #{tpu_custom_call.1} parent=1 // pred_check
      _
    $region15: #{tpu_custom_call.1} parent=1 // pred_check_branch
      %21 = sbr.rel (0) target = $region17
    $region16: #{tpu_custom_call.1} parent=1 // pred_region
      _
    $region17: #{tpu_custom_call.1} parent=1 // pred_fallthru
      _
    // Predicated region
    $region18: #{tpu_custom_call.1} parent=1 // pred_check
      _
    $region19: #{tpu_custom_call.1} parent=1 // pred_check_branch
      %23 = sbr.rel (0) target = $region21
    $region20: #{tpu_custom_call.1} parent=1 // pred_region
      _
    $region21: #{tpu_custom_call.1} parent=1 // pred_fallthru
      _
    // Predicated region
    $region22: #{tpu_custom_call.1} parent=1 // pred_check
      _
    $region23: #{tpu_custom_call.1} parent=1 // pred_check_branch
      %25 = sbr.rel (0) target = $region25
    $region24: #{tpu_custom_call.1} parent=1 // pred_region
      _
    $region25: #{tpu_custom_call.1} parent=1 // pred_fallthru
      _
    %v27 = vld [vmem:[%s1] sm:$0xf]
    %v28 = vld [vmem:[%s1 + $0x4] sm:$0xf]
    %v29 = vld [vmem:[%s1 + $0x8] sm:$0xf]
    %v30 = vld [vmem:[%s1 + $0xc] sm:$0xf]
    %v31 = vld [vmem:[%s1 + $0x10] sm:$0xf]
    %v32 = vld [vmem:[%s1 + $0x14] sm:$0xf]
    %v33 = vld [vmem:[%s1 + $0x18] sm:$0xf]
    %v34 = vld [vmem:[%s1 + $0x1c] sm:$0xf]
    %v35 = vld [vmem:[%s1 + $0x20] sm:$0xf]
    %v36 = vld [vmem:[%s1 + $0x24] sm:$0xf]
    %v37 = vld [vmem:[%s1 + $0x28] sm:$0xf]
    %v38 = vld [vmem:[%s1 + $0x2c] sm:$0xf]
    %v39 = vld [vmem:[%s1 + $0x30] sm:$0xf]
    %v40 = vld [vmem:[%s1 + $0x34] sm:$0xf]
    %v41 = vld [vmem:[%s1 + $0x38] sm:$0xf]
    %v42 = vld [vmem:[%s1 + $0x3c] sm:$0xf]
    %v43 = vld [vmem:[%s0] sm:$0xf]
    %v44 = vld [vmem:[%s0 + $0x4] sm:$0xf]
    %v45 = vld [vmem:[%s3] sm:$0xff]
    %v46 = vld [vmem:[%s3 + $0x8] sm:$0xff]
    %v47 = vld [vmem:[%s3 + $0x10] sm:$0xff]
    %v48 = vld [vmem:[%s3 + $0x18] sm:$0xff]
    %v49 = vld [vmem:[%s3 + $0x20] sm:$0xff]
    %v50 = vld [vmem:[%s3 + $0x28] sm:$0xff]
    %v51 = vld [vmem:[%s3 + $0x30] sm:$0xff]
    %v52 = vld [vmem:[%s3 + $0x38] sm:$0xff]
    %v53 = vld [vmem:[%s3 + $0x40] sm:$0xff]
    %v54 = vld [vmem:[%s3 + $0x48] sm:$0xff]
    %v55 = vld [vmem:[%s3 + $0x50] sm:$0xff]
    %v56 = vld [vmem:[%s3 + $0x58] sm:$0xff]
    %v57 = vld [vmem:[%s3 + $0x60] sm:$0xff]
    %v58 = vld [vmem:[%s3 + $0x68] sm:$0xff]
    %v59 = vld [vmem:[%s3 + $0x70] sm:$0xff]
    %v60 = vld [vmem:[%s3 + $0x78] sm:$0xff]
    %62 = vset.pattern.permute.xlu0 0
    %63 = vperm.xlu0 %62, %v45
    %v64 = vpop.permute.xlu0 %63
    %67 = vset.pattern.permute.xlu0 0
    %68 = vperm.xlu0 %67, %v46
    %v69 = vpop.permute.xlu0 %68
    %72 = vset.pattern.permute.xlu0 0
    %73 = vperm.xlu0 %72, %v47
    %v74 = vpop.permute.xlu0 %73
    %77 = vset.pattern.permute.xlu0 0
    %78 = vperm.xlu0 %77, %v48
    %v79 = vpop.permute.xlu0 %78
    %82 = vset.pattern.permute.xlu0 0
    %83 = vperm.xlu0 %82, %v49
    %v84 = vpop.permute.xlu0 %83
    %87 = vset.pattern.permute.xlu0 0
    %88 = vperm.xlu0 %87, %v50
    %v89 = vpop.permute.xlu0 %88
    %92 = vset.pattern.permute.xlu0 0
    %93 = vperm.xlu0 %92, %v51
    %v94 = vpop.permute.xlu0 %93
    %97 = vset.pattern.permute.xlu0 0
    %98 = vperm.xlu0 %97, %v52
    %v99 = vpop.permute.xlu0 %98
    %102 = vset.pattern.permute.xlu0 0
    %103 = vperm.xlu0 %102, %v53
    %v104 = vpop.permute.xlu0 %103
    %107 = vset.pattern.permute.xlu0 0
    %108 = vperm.xlu0 %107, %v54
    %v109 = vpop.permute.xlu0 %108
    %112 = vset.pattern.permute.xlu0 0
    %113 = vperm.xlu0 %112, %v55
    %v114 = vpop.permute.xlu0 %113
    %117 = vset.pattern.permute.xlu0 0
    %118 = vperm.xlu0 %117, %v56
    %v119 = vpop.permute.xlu0 %118
    %122 = vset.pattern.permute.xlu0 0
    %123 = vperm.xlu0 %122, %v57
    %v124 = vpop.permute.xlu0 %123
    %127 = vset.pattern.permute.xlu0 0
    %128 = vperm.xlu0 %127, %v58
    %v129 = vpop.permute.xlu0 %128
    %132 = vset.pattern.permute.xlu0 0
    %133 = vperm.xlu0 %132, %v59
    %v134 = vpop.permute.xlu0 %133
    %137 = vset.pattern.permute.xlu0 0
    %138 = vperm.xlu0 %137, %v60
    %v139 = vpop.permute.xlu0 %138
    %v157 = vunpack.c.l.b16 %v27
    %v158 = vunpack.c.l.b16 %v28
    %v159 = vunpack.c.l.b16 %v29
    %v160 = vunpack.c.l.b16 %v30
    %v161 = vunpack.c.l.b16 %v31
    %v162 = vunpack.c.l.b16 %v32
    %v163 = vunpack.c.l.b16 %v33
    %v164 = vunpack.c.l.b16 %v34
    %v165 = vunpack.c.l.b16 %v35
    %v166 = vunpack.c.l.b16 %v36
    %v167 = vunpack.c.l.b16 %v37
    %v168 = vunpack.c.l.b16 %v38
    %v169 = vunpack.c.l.b16 %v39
    %v170 = vunpack.c.l.b16 %v40
    %v171 = vunpack.c.l.b16 %v41
    %v172 = vunpack.c.l.b16 %v42
    %v173 = vpack.c.b16 %v158, %v157
    %v174 = vpack.c.b16 %v160, %v159
    %v175 = vpack.c.b16 %v162, %v161
    %v176 = vpack.c.b16 %v164, %v163
    %v177 = vpack.c.b16 %v166, %v165
    %v178 = vpack.c.b16 %v168, %v167
    %v179 = vpack.c.b16 %v170, %v169
    %v180 = vpack.c.b16 %v172, %v171
    %v183 = vunpack.c.l.b16 %v43
    %v184 = vunpack.c.l.b16 %v44
    %v185 = vpack.c.b16 %v184, %v183
    %vm187 = vcmask 130048
    %v189 = vsel %vm187, %v173, 0
    %v192 = vsel %vm187, %v174, 0
    %v195 = vsel %vm187, %v175, 0
    %v198 = vsel %vm187, %v176, 0
    %v201 = vsel %vm187, %v177, 0
    %v204 = vsel %vm187, %v178, 0
    %v207 = vsel %vm187, %v179, 0
    %v210 = vsel %vm187, %v180, 0
    %212 = vmatprep.subr.bf16.mxu0 0
    %213 = vmatpush1.bf16.msra.mxu0 %v185
    %214 = vmatprep.subr.bf16.mxu0 0
    %215 = vmatpush1.bf16.msra.mxu0 0
    %216 = vmatprep.subr.bf16.mxu0 0
    %217 = vmatpush1.bf16.msra.mxu0 0
    %218 = vmatprep.subr.bf16.mxu0 0
    %219 = vmatpush1.bf16.msra.mxu0 0
    %220 = vmatprep.subr.bf16.mxu0 0
    %221 = vmatpush1.bf16.msra.mxu0 0
    %222 = vmatprep.subr.bf16.mxu0 0
    %223 = vmatpush1.bf16.msra.mxu0 0
    %224 = vmatprep.subr.bf16.mxu0 0
    %225 = vmatpush1.bf16.msra.mxu0 0
    %226 = vmatprep.subr.bf16.mxu0 0
    %227 = vmatpush1.bf16.msra.mxu0 0
    %228 = vmatprep.subr.bf16.mxu0 0
    %229 = vmatpush1.bf16.msra.mxu0 0
    %230 = vmatprep.subr.bf16.mxu0 0
    %231 = vmatpush1.bf16.msra.mxu0 0
    %232 = vmatprep.subr.bf16.mxu0 0
    %233 = vmatpush1.bf16.msra.mxu0 0
    %234 = vmatprep.subr.bf16.mxu0 0
    %235 = vmatpush1.bf16.msra.mxu0 0
    %236 = vmatprep.subr.bf16.mxu0 0
    %237 = vmatpush1.bf16.msra.mxu0 0
    %238 = vmatprep.subr.bf16.mxu0 0
    %239 = vmatpush1.bf16.msra.mxu0 0
    %240 = vmatprep.subr.bf16.mxu0 0
    %241 = vmatpush1.bf16.msra.mxu0 0
    %242 = vmatprep.subr.bf16.mxu0 0
    %243 = vmatpush1.bf16.msra.mxu0 0
    %244 = vmatprep.mubr.bf16.mxu0 0
    %245 = vmatmul.mubr.bf16.gmra.mrb[0].mxu0 %v189
    %v246 = vpop.f32.mrb[0].mxu0
    %v247 = vadd.f32 %v64, %v246
    %v248 = vpop.f32.mrb[0].mxu0
    %v249 = vpop.f32.mrb[0].mxu0
    %v250 = vadd.f32 %v69, %v249
    %v251 = vpop.f32.mrb[0].mxu0
    %252 = vmatprep.mubr.bf16.mxu0 0
    %253 = vmatmul.mubr.bf16.gmra.mrb[0].mxu0 %v192
    %v254 = vpop.f32.mrb[0].mxu0
    %v255 = vadd.f32 %v74, %v254
    %v256 = vpop.f32.mrb[0].mxu0
    %v257 = vpop.f32.mrb[0].mxu0
    %v258 = vadd.f32 %v79, %v257
    %v259 = vpop.f32.mrb[0].mxu0
    %260 = vmatprep.mubr.bf16.mxu0 0
    %261 = vmatmul.mubr.bf16.gmra.mrb[0].mxu0 %v195
    %v262 = vpop.f32.mrb[0].mxu0
    %v263 = vadd.f32 %v84, %v262
    %v264 = vpop.f32.mrb[0].mxu0
    %v265 = vpop.f32.mrb[0].mxu0
    %v266 = vadd.f32 %v89, %v265
    %v267 = vpop.f32.mrb[0].mxu0
    %268 = vmatprep.mubr.bf16.mxu0 0
    %269 = vmatmul.mubr.bf16.gmra.mrb[0].mxu0 %v198
    %v270 = vpop.f32.mrb[0].mxu0
    %v271 = vadd.f32 %v94, %v270
    %v272 = vpop.f32.mrb[0].mxu0
    %v273 = vpop.f32.mrb[0].mxu0
    %v274 = vadd.f32 %v99, %v273
    %v275 = vpop.f32.mrb[0].mxu0
    %276 = vmatprep.mubr.bf16.mxu0 0
    %277 = vmatmul.mubr.bf16.gmra.mrb[0].mxu0 %v201
    %v278 = vpop.f32.mrb[0].mxu0
    %v279 = vadd.f32 %v104, %v278
    %v280 = vpop.f32.mrb[0].mxu0
    %v281 = vpop.f32.mrb[0].mxu0
    %v282 = vadd.f32 %v109, %v281
    %v283 = vpop.f32.mrb[0].mxu0
    %284 = vmatprep.mubr.bf16.mxu0 0
    %285 = vmatmul.mubr.bf16.gmra.mrb[0].mxu0 %v204
    %v286 = vpop.f32.mrb[0].mxu0
    %v287 = vadd.f32 %v114, %v286
    %v288 = vpop.f32.mrb[0].mxu0
    %v289 = vpop.f32.mrb[0].mxu0
    %v290 = vadd.f32 %v119, %v289
    %v291 = vpop.f32.mrb[0].mxu0
    %292 = vmatprep.mubr.bf16.mxu0 0
    %293 = vmatmul.mubr.bf16.gmra.mrb[0].mxu0 %v207
    %v294 = vpop.f32.mrb[0].mxu0
    %v295 = vadd.f32 %v124, %v294
    %v296 = vpop.f32.mrb[0].mxu0
    %v297 = vpop.f32.mrb[0].mxu0
    %v298 = vadd.f32 %v129, %v297
    %v299 = vpop.f32.mrb[0].mxu0
    %300 = vmatprep.mubr.bf16.mxu0 0
    %301 = vmatmul.mubr.bf16.gmra.mrb[0].mxu0 %v210
    %v302 = vpop.f32.mrb[0].mxu0
    %v303 = vadd.f32 %v134, %v302
    %v304 = vpop.f32.mrb[0].mxu0
    %v305 = vpop.f32.mrb[0].mxu0
    %v306 = vadd.f32 %v139, %v305
    %v307 = vpop.f32.mrb[0].mxu0
    %308 = vdwg.mxu0
    %v309 = vld [vmem:[%s2] sm:$0xf]
    %v310 = vld [vmem:[%s2 + $0x4] sm:$0xf]
    %v311 = vld [vmem:[%s2 + $0x8] sm:$0xf]
    %v312 = vld [vmem:[%s2 + $0xc] sm:$0xf]
    %v313 = vld [vmem:[%s2 + $0x10] sm:$0xf]
    %v314 = vld [vmem:[%s2 + $0x14] sm:$0xf]
    %v315 = vld [vmem:[%s2 + $0x18] sm:$0xf]
    %v316 = vld [vmem:[%s2 + $0x1c] sm:$0xf]
    %v317 = vld [vmem:[%s2 + $0x20] sm:$0xf]
    %v318 = vld [vmem:[%s2 + $0x24] sm:$0xf]
    %v319 = vld [vmem:[%s2 + $0x28] sm:$0xf]
    %v320 = vld [vmem:[%s2 + $0x2c] sm:$0xf]
    %v321 = vld [vmem:[%s2 + $0x30] sm:$0xf]
    %v322 = vld [vmem:[%s2 + $0x34] sm:$0xf]
    %v323 = vld [vmem:[%s2 + $0x38] sm:$0xf]
    %v324 = vld [vmem:[%s2 + $0x3c] sm:$0xf]
    %v325 = vpack.c.bf16 %v250, %v247
    %v326 = vpack.c.bf16 %v258, %v255
    %v327 = vpack.c.bf16 %v266, %v263
    %v328 = vpack.c.bf16 %v274, %v271
    %v329 = vpack.c.bf16 %v282, %v279
    %v330 = vpack.c.bf16 %v290, %v287
    %v331 = vpack.c.bf16 %v298, %v295
    %v332 = vpack.c.bf16 %v306, %v303
    %s333 = scalar_lea.vmem %s3, 128
    %v334 = vld [vmem:[%s333] sm:$0xff]
    %v335 = vld [vmem:[%s333 + $0x8] sm:$0xff]
    %v336 = vld [vmem:[%s333 + $0x10] sm:$0xff]
    %v337 = vld [vmem:[%s333 + $0x18] sm:$0xff]
    %v338 = vld [vmem:[%s333 + $0x20] sm:$0xff]
    %v339 = vld [vmem:[%s333 + $0x28] sm:$0xff]
    %v340 = vld [vmem:[%s333 + $0x30] sm:$0xff]
    %v341 = vld [vmem:[%s333 + $0x38] sm:$0xff]
    %v342 = vld [vmem:[%s333 + $0x40] sm:$0xff]
    %v343 = vld [vmem:[%s333 + $0x48] sm:$0xff]
    %v344 = vld [vmem:[%s333 + $0x50] sm:$0xff]
    %v345 = vld [vmem:[%s333 + $0x58] sm:$0xff]
    %v346 = vld [vmem:[%s333 + $0x60] sm:$0xff]
    %v347 = vld [vmem:[%s333 + $0x68] sm:$0xff]
    %v348 = vld [vmem:[%s333 + $0x70] sm:$0xff]
    %v349 = vld [vmem:[%s333 + $0x78] sm:$0xff]
    %351 = vset.pattern.permute.xlu0 0
    %352 = vperm.xlu0 %351, %v334
    %v353 = vpop.permute.xlu0 %352
    %356 = vset.pattern.permute.xlu0 0
    %357 = vperm.xlu0 %356, %v335
    %v358 = vpop.permute.xlu0 %357
    %361 = vset.pattern.permute.xlu0 0
    %362 = vperm.xlu0 %361, %v336
    %v363 = vpop.permute.xlu0 %362
    %366 = vset.pattern.permute.xlu0 0
    %367 = vperm.xlu0 %366, %v337
    %v368 = vpop.permute.xlu0 %367
    %371 = vset.pattern.permute.xlu0 0
    %372 = vperm.xlu0 %371, %v338
    %v373 = vpop.permute.xlu0 %372
    %376 = vset.pattern.permute.xlu0 0
    %377 = vperm.xlu0 %376, %v339
    %v378 = vpop.permute.xlu0 %377
    %381 = vset.pattern.permute.xlu0 0
    %382 = vperm.xlu0 %381, %v340
    %v383 = vpop.permute.xlu0 %382
    %386 = vset.pattern.permute.xlu0 0
    %387 = vperm.xlu0 %386, %v341
    %v388 = vpop.permute.xlu0 %387
    %391 = vset.pattern.permute.xlu0 0
    %392 = vperm.xlu0 %391, %v342
    %v393 = vpop.permute.xlu0 %392
    %396 = vset.pattern.permute.xlu0 0
    %397 = vperm.xlu0 %396, %v343
    %v398 = vpop.permute.xlu0 %397
    %401 = vset.pattern.permute.xlu0 0
    %402 = vperm.xlu0 %401, %v344
    %v403 = vpop.permute.xlu0 %402
    %406 = vset.pattern.permute.xlu0 0
    %407 = vperm.xlu0 %406, %v345
    %v408 = vpop.permute.xlu0 %407
    %411 = vset.pattern.permute.xlu0 0
    %412 = vperm.xlu0 %411, %v346
    %v413 = vpop.permute.xlu0 %412
    %416 = vset.pattern.permute.xlu0 0
    %417 = vperm.xlu0 %416, %v347
    %v418 = vpop.permute.xlu0 %417
    %421 = vset.pattern.permute.xlu0 0
    %422 = vperm.xlu0 %421, %v348
    %v423 = vpop.permute.xlu0 %422
    %426 = vset.pattern.permute.xlu0 0
    %427 = vperm.xlu0 %426, %v349
    %v428 = vpop.permute.xlu0 %427
    %v446 = vunpack.c.l.b16 %v309
    %v447 = vunpack.c.l.b16 %v310
    %v448 = vunpack.c.l.b16 %v311
    %v449 = vunpack.c.l.b16 %v312
    %v450 = vunpack.c.l.b16 %v313
    %v451 = vunpack.c.l.b16 %v314
    %v452 = vunpack.c.l.b16 %v315
    %v453 = vunpack.c.l.b16 %v316
    %v454 = vunpack.c.l.b16 %v317
    %v455 = vunpack.c.l.b16 %v318
    %v456 = vunpack.c.l.b16 %v319
    %v457 = vunpack.c.l.b16 %v320
    %v458 = vunpack.c.l.b16 %v321
    %v459 = vunpack.c.l.b16 %v322
    %v460 = vunpack.c.l.b16 %v323
    %v461 = vunpack.c.l.b16 %v324
    %v462 = vpack.c.b16 %v447, %v446
    %v463 = vpack.c.b16 %v449, %v448
    %v464 = vpack.c.b16 %v451, %v450
    %v465 = vpack.c.b16 %v453, %v452
    %v466 = vpack.c.b16 %v455, %v454
    %v467 = vpack.c.b16 %v457, %v456
    %v468 = vpack.c.b16 %v459, %v458
    %v469 = vpack.c.b16 %v461, %v460
    %478 = vmatprep.subr.bf16.mxu0 0
    %479 = vmatpush1.bf16.msra.mxu0 %v325
    %480 = vmatprep.subr.bf16.mxu0 0
    %481 = vmatpush1.bf16.msra.mxu0 %v326
    %482 = vmatprep.subr.bf16.mxu0 0
    %483 = vmatpush1.bf16.msra.mxu0 %v327
    %484 = vmatprep.subr.bf16.mxu0 0
    %485 = vmatpush1.bf16.msra.mxu0 %v328
    %486 = vmatprep.subr.bf16.mxu0 0
    %487 = vmatpush1.bf16.msra.mxu0 %v329
    %488 = vmatprep.subr.bf16.mxu0 0
    %489 = vmatpush1.bf16.msra.mxu0 %v330
    %490 = vmatprep.subr.bf16.mxu0 0
    %491 = vmatpush1.bf16.msra.mxu0 %v331
    %492 = vmatprep.subr.bf16.mxu0 0
    %493 = vmatpush1.bf16.msra.mxu0 %v332
    %494 = vmatprep.subr.bf16.mxu0 0
    %495 = vmatpush1.bf16.msra.mxu0 0
    %496 = vmatprep.subr.bf16.mxu0 0
    %497 = vmatpush1.bf16.msra.mxu0 0
    %498 = vmatprep.subr.bf16.mxu0 0
    %499 = vmatpush1.bf16.msra.mxu0 0
    %500 = vmatprep.subr.bf16.mxu0 0
    %501 = vmatpush1.bf16.msra.mxu0 0
    %502 = vmatprep.subr.bf16.mxu0 0
    %503 = vmatpush1.bf16.msra.mxu0 0
    %504 = vmatprep.subr.bf16.mxu0 0
    %505 = vmatpush1.bf16.msra.mxu0 0
    %506 = vmatprep.subr.bf16.mxu0 0
    %507 = vmatpush1.bf16.msra.mxu0 0
    %508 = vmatprep.subr.bf16.mxu0 0
    %509 = vmatpush1.bf16.msra.mxu0 0
    %510 = vmatprep.mubr.bf16.mxu0 0
    %511 = vmatmul.mubr.bf16.gmra.mrb[0].mxu0 %v462
    %v512 = vpop.f32.mrb[0].mxu0
    %v513 = vadd.f32 %v353, %v512
    %v514 = vpop.f32.mrb[0].mxu0
    %v515 = vpop.f32.mrb[0].mxu0
    %v516 = vadd.f32 %v358, %v515
    %v517 = vpop.f32.mrb[0].mxu0
    %518 = vmatprep.mubr.bf16.mxu0 0
    %519 = vmatmul.mubr.bf16.gmra.mrb[0].mxu0 %v463
    %v520 = vpop.f32.mrb[0].mxu0
    %v521 = vadd.f32 %v363, %v520
    %v522 = vpop.f32.mrb[0].mxu0
    %v523 = vpop.f32.mrb[0].mxu0
    %v524 = vadd.f32 %v368, %v523
    %v525 = vpop.f32.mrb[0].mxu0
    %526 = vmatprep.mubr.bf16.mxu0 0
    %527 = vmatmul.mubr.bf16.gmra.mrb[0].mxu0 %v464
    %v528 = vpop.f32.mrb[0].mxu0
    %v529 = vadd.f32 %v373, %v528
    %v530 = vpop.f32.mrb[0].mxu0
    %v531 = vpop.f32.mrb[0].mxu0
    %v532 = vadd.f32 %v378, %v531
    %v533 = vpop.f32.mrb[0].mxu0
    %534 = vmatprep.mubr.bf16.mxu0 0
    %535 = vmatmul.mubr.bf16.gmra.mrb[0].mxu0 %v465
    %v536 = vpop.f32.mrb[0].mxu0
    %v537 = vadd.f32 %v383, %v536
    %v538 = vpop.f32.mrb[0].mxu0
    %v539 = vpop.f32.mrb[0].mxu0
    %v540 = vadd.f32 %v388, %v539
    %v541 = vpop.f32.mrb[0].mxu0
    %542 = vmatprep.mubr.bf16.mxu0 0
    %543 = vmatmul.mubr.bf16.gmra.mrb[0].mxu0 %v466
    %v544 = vpop.f32.mrb[0].mxu0
    %v545 = vadd.f32 %v393, %v544
    %v546 = vpop.f32.mrb[0].mxu0
    %v547 = vpop.f32.mrb[0].mxu0
    %v548 = vadd.f32 %v398, %v547
    %v549 = vpop.f32.mrb[0].mxu0
    %550 = vmatprep.mubr.bf16.mxu0 0
    %551 = vmatmul.mubr.bf16.gmra.mrb[0].mxu0 %v467
    %v552 = vpop.f32.mrb[0].mxu0
    %v553 = vadd.f32 %v403, %v552
    %v554 = vpop.f32.mrb[0].mxu0
    %v555 = vpop.f32.mrb[0].mxu0
    %v556 = vadd.f32 %v408, %v555
    %v557 = vpop.f32.mrb[0].mxu0
    %558 = vmatprep.mubr.bf16.mxu0 0
    %559 = vmatmul.mubr.bf16.gmra.mrb[0].mxu0 %v468
    %v560 = vpop.f32.mrb[0].mxu0
    %v561 = vadd.f32 %v413, %v560
    %v562 = vpop.f32.mrb[0].mxu0
    %v563 = vpop.f32.mrb[0].mxu0
    %v564 = vadd.f32 %v418, %v563
    %v565 = vpop.f32.mrb[0].mxu0
    %566 = vmatprep.mubr.bf16.mxu0 0
    %567 = vmatmul.mubr.bf16.gmra.mrb[0].mxu0 %v469
    %v568 = vpop.f32.mrb[0].mxu0
    %v569 = vadd.f32 %v423, %v568
    %v570 = vpop.f32.mrb[0].mxu0
    %v571 = vpop.f32.mrb[0].mxu0
    %v572 = vadd.f32 %v428, %v571
    %v573 = vpop.f32.mrb[0].mxu0
    %574 = vdwg.mxu0
    %v575 = vmax.f32 %v513, 0.0
    %v576 = vmax.f32 %v516, 0.0
    %v577 = vmax.f32 %v521, 0.0
    %v578 = vmax.f32 %v524, 0.0
    %v579 = vmax.f32 %v529, 0.0
    %v580 = vmax.f32 %v532, 0.0
    %v581 = vmax.f32 %v537, 0.0
    %v582 = vmax.f32 %v540, 0.0
    %v583 = vmax.f32 %v545, 0.0
    %v584 = vmax.f32 %v548, 0.0
    %v585 = vmax.f32 %v553, 0.0
    %v586 = vmax.f32 %v556, 0.0
    %v587 = vmax.f32 %v561, 0.0
    %v588 = vmax.f32 %v564, 0.0
    %v589 = vmax.f32 %v569, 0.0
    %v590 = vmax.f32 %v572, 0.0
    %s591 = scalar_lea.vmem %s2, 64
    %v592 = vld [vmem:[%s591] sm:$0xf]
    %v593 = vld [vmem:[%s591 + $0x4] sm:$0xf]
    %v594 = vld [vmem:[%s591 + $0x8] sm:$0xf]
    %v595 = vld [vmem:[%s591 + $0xc] sm:$0xf]
    %v596 = vld [vmem:[%s591 + $0x10] sm:$0xf]
    %v597 = vld [vmem:[%s591 + $0x14] sm:$0xf]
    %v598 = vld [vmem:[%s591 + $0x18] sm:$0xf]
    %v599 = vld [vmem:[%s591 + $0x1c] sm:$0xf]
    %v600 = vld [vmem:[%s591 + $0x20] sm:$0xf]
    %v601 = vld [vmem:[%s591 + $0x24] sm:$0xf]
    %v602 = vld [vmem:[%s591 + $0x28] sm:$0xf]
    %v603 = vld [vmem:[%s591 + $0x2c] sm:$0xf]
    %v604 = vld [vmem:[%s591 + $0x30] sm:$0xf]
    %v605 = vld [vmem:[%s591 + $0x34] sm:$0xf]
    %v606 = vld [vmem:[%s591 + $0x38] sm:$0xf]
    %v607 = vld [vmem:[%s591 + $0x3c] sm:$0xf]
    %v608 = vpack.c.bf16 %v576, %v575
    %v609 = vpack.c.bf16 %v578, %v577
    %v610 = vpack.c.bf16 %v580, %v579
    %v611 = vpack.c.bf16 %v582, %v581
    %v612 = vpack.c.bf16 %v584, %v583
    %v613 = vpack.c.bf16 %v586, %v585
    %v614 = vpack.c.bf16 %v588, %v587
    %v615 = vpack.c.bf16 %v590, %v589
    %s616 = scalar_lea.vmem %s3, 256
    %v617 = vld [vmem:[%s616] sm:$0xff]
    %v618 = vld [vmem:[%s616 + $0x8] sm:$0xff]
    %v619 = vld [vmem:[%s616 + $0x10] sm:$0xff]
    %v620 = vld [vmem:[%s616 + $0x18] sm:$0xff]
    %v621 = vld [vmem:[%s616 + $0x20] sm:$0xff]
    %v622 = vld [vmem:[%s616 + $0x28] sm:$0xff]
    %v623 = vld [vmem:[%s616 + $0x30] sm:$0xff]
    %v624 = vld [vmem:[%s616 + $0x38] sm:$0xff]
    %v625 = vld [vmem:[%s616 + $0x40] sm:$0xff]
    %v626 = vld [vmem:[%s616 + $0x48] sm:$0xff]
    %v627 = vld [vmem:[%s616 + $0x50] sm:$0xff]
    %v628 = vld [vmem:[%s616 + $0x58] sm:$0xff]
    %v629 = vld [vmem:[%s616 + $0x60] sm:$0xff]
    %v630 = vld [vmem:[%s616 + $0x68] sm:$0xff]
    %v631 = vld [vmem:[%s616 + $0x70] sm:$0xff]
    %v632 = vld [vmem:[%s616 + $0x78] sm:$0xff]
    %634 = vset.pattern.permute.xlu0 0
    %635 = vperm.xlu0 %634, %v617
    %v636 = vpop.permute.xlu0 %635
    %639 = vset.pattern.permute.xlu0 0
    %640 = vperm.xlu0 %639, %v618
    %v641 = vpop.permute.xlu0 %640
    %644 = vset.pattern.permute.xlu0 0
    %645 = vperm.xlu0 %644, %v619
    %v646 = vpop.permute.xlu0 %645
    %649 = vset.pattern.permute.xlu0 0
    %650 = vperm.xlu0 %649, %v620
    %v651 = vpop.permute.xlu0 %650
    %654 = vset.pattern.permute.xlu0 0
    %655 = vperm.xlu0 %654, %v621
    %v656 = vpop.permute.xlu0 %655
    %659 = vset.pattern.permute.xlu0 0
    %660 = vperm.xlu0 %659, %v622
    %v661 = vpop.permute.xlu0 %660
    %664 = vset.pattern.permute.xlu0 0
    %665 = vperm.xlu0 %664, %v623
    %v666 = vpop.permute.xlu0 %665
    %669 = vset.pattern.permute.xlu0 0
    %670 = vperm.xlu0 %669, %v624
    %v671 = vpop.permute.xlu0 %670
    %674 = vset.pattern.permute.xlu0 0
    %675 = vperm.xlu0 %674, %v625
    %v676 = vpop.permute.xlu0 %675
    %679 = vset.pattern.permute.xlu0 0
    %680 = vperm.xlu0 %679, %v626
    %v681 = vpop.permute.xlu0 %680
    %684 = vset.pattern.permute.xlu0 0
    %685 = vperm.xlu0 %684, %v627
    %v686 = vpop.permute.xlu0 %685
    %689 = vset.pattern.permute.xlu0 0
    %690 = vperm.xlu0 %689, %v628
    %v691 = vpop.permute.xlu0 %690
    %694 = vset.pattern.permute.xlu0 0
    %695 = vperm.xlu0 %694, %v629
    %v696 = vpop.permute.xlu0 %695
    %699 = vset.pattern.permute.xlu0 0
    %700 = vperm.xlu0 %699, %v630
    %v701 = vpop.permute.xlu0 %700
    %704 = vset.pattern.permute.xlu0 0
    %705 = vperm.xlu0 %704, %v631
    %v706 = vpop.permute.xlu0 %705
    %709 = vset.pattern.permute.xlu0 0
    %710 = vperm.xlu0 %709, %v632
    %v711 = vpop.permute.xlu0 %710
    %v729 = vunpack.c.l.b16 %v592
    %v730 = vunpack.c.l.b16 %v593
    %v731 = vunpack.c.l.b16 %v594
    %v732 = vunpack.c.l.b16 %v595
    %v733 = vunpack.c.l.b16 %v596
    %v734 = vunpack.c.l.b16 %v597
    %v735 = vunpack.c.l.b16 %v598
    %v736 = vunpack.c.l.b16 %v599
    %v737 = vunpack.c.l.b16 %v600
    %v738 = vunpack.c.l.b16 %v601
    %v739 = vunpack.c.l.b16 %v602
    %v740 = vunpack.c.l.b16 %v603
    %v741 = vunpack.c.l.b16 %v604
    %v742 = vunpack.c.l.b16 %v605
    %v743 = vunpack.c.l.b16 %v606
    %v744 = vunpack.c.l.b16 %v607
    %v745 = vpack.c.b16 %v730, %v729
    %v746 = vpack.c.b16 %v732, %v731
    %v747 = vpack.c.b16 %v734, %v733
    %v748 = vpack.c.b16 %v736, %v735
    %v749 = vpack.c.b16 %v738, %v737
    %v750 = vpack.c.b16 %v740, %v739
    %v751 = vpack.c.b16 %v742, %v741
    %v752 = vpack.c.b16 %v744, %v743
    %761 = vmatprep.subr.bf16.mxu0 0
    %762 = vmatpush1.bf16.msra.mxu0 %v608
    %763 = vmatprep.subr.bf16.mxu0 0
    %764 = vmatpush1.bf16.msra.mxu0 %v609
    %765 = vmatprep.subr.bf16.mxu0 0
    %766 = vmatpush1.bf16.msra.mxu0 %v610
    %767 = vmatprep.subr.bf16.mxu0 0
    %768 = vmatpush1.bf16.msra.mxu0 %v611
    %769 = vmatprep.subr.bf16.mxu0 0
    %770 = vmatpush1.bf16.msra.mxu0 %v612
    %771 = vmatprep.subr.bf16.mxu0 0
    %772 = vmatpush1.bf16.msra.mxu0 %v613
    %773 = vmatprep.subr.bf16.mxu0 0
    %774 = vmatpush1.bf16.msra.mxu0 %v614
    %775 = vmatprep.subr.bf16.mxu0 0
    %776 = vmatpush1.bf16.msra.mxu0 %v615
    %777 = vmatprep.subr.bf16.mxu0 0
    %778 = vmatpush1.bf16.msra.mxu0 0
    %779 = vmatprep.subr.bf16.mxu0 0
    %780 = vmatpush1.bf16.msra.mxu0 0
    %781 = vmatprep.subr.bf16.mxu0 0
    %782 = vmatpush1.bf16.msra.mxu0 0
    %783 = vmatprep.subr.bf16.mxu0 0
    %784 = vmatpush1.bf16.msra.mxu0 0
    %785 = vmatprep.subr.bf16.mxu0 0
    %786 = vmatpush1.bf16.msra.mxu0 0
    %787 = vmatprep.subr.bf16.mxu0 0
    %788 = vmatpush1.bf16.msra.mxu0 0
    %789 = vmatprep.subr.bf16.mxu0 0
    %790 = vmatpush1.bf16.msra.mxu0 0
    %791 = vmatprep.subr.bf16.mxu0 0
    %792 = vmatpush1.bf16.msra.mxu0 0
    %793 = vmatprep.mubr.bf16.mxu0 0
    %794 = vmatmul.mubr.bf16.gmra.mrb[0].mxu0 %v745
    %v795 = vpop.f32.mrb[0].mxu0
    %v796 = vadd.f32 %v636, %v795
    %v797 = vpop.f32.mrb[0].mxu0
    %v798 = vpop.f32.mrb[0].mxu0
    %v799 = vadd.f32 %v641, %v798
    %v800 = vpop.f32.mrb[0].mxu0
    %801 = vmatprep.mubr.bf16.mxu0 0
    %802 = vmatmul.mubr.bf16.gmra.mrb[0].mxu0 %v746
    %v803 = vpop.f32.mrb[0].mxu0
    %v804 = vadd.f32 %v646, %v803
    %v805 = vpop.f32.mrb[0].mxu0
    %v806 = vpop.f32.mrb[0].mxu0
    %v807 = vadd.f32 %v651, %v806
    %v808 = vpop.f32.mrb[0].mxu0
    %809 = vmatprep.mubr.bf16.mxu0 0
    %810 = vmatmul.mubr.bf16.gmra.mrb[0].mxu0 %v747
    %v811 = vpop.f32.mrb[0].mxu0
    %v812 = vadd.f32 %v656, %v811
    %v813 = vpop.f32.mrb[0].mxu0
    %v814 = vpop.f32.mrb[0].mxu0
    %v815 = vadd.f32 %v661, %v814
    %v816 = vpop.f32.mrb[0].mxu0
    %817 = vmatprep.mubr.bf16.mxu0 0
    %818 = vmatmul.mubr.bf16.gmra.mrb[0].mxu0 %v748
    %v819 = vpop.f32.mrb[0].mxu0
    %v820 = vadd.f32 %v666, %v819
    %v821 = vpop.f32.mrb[0].mxu0
    %v822 = vpop.f32.mrb[0].mxu0
    %v823 = vadd.f32 %v671, %v822
    %v824 = vpop.f32.mrb[0].mxu0
    %825 = vmatprep.mubr.bf16.mxu0 0
    %826 = vmatmul.mubr.bf16.gmra.mrb[0].mxu0 %v749
    %v827 = vpop.f32.mrb[0].mxu0
    %v828 = vadd.f32 %v676, %v827
    %v829 = vpop.f32.mrb[0].mxu0
    %v830 = vpop.f32.mrb[0].mxu0
    %v831 = vadd.f32 %v681, %v830
    %v832 = vpop.f32.mrb[0].mxu0
    %833 = vmatprep.mubr.bf16.mxu0 0
    %834 = vmatmul.mubr.bf16.gmra.mrb[0].mxu0 %v750
    %v835 = vpop.f32.mrb[0].mxu0
    %v836 = vadd.f32 %v686, %v835
    %v837 = vpop.f32.mrb[0].mxu0
    %v838 = vpop.f32.mrb[0].mxu0
    %v839 = vadd.f32 %v691, %v838
    %v840 = vpop.f32.mrb[0].mxu0
    %841 = vmatprep.mubr.bf16.mxu0 0
    %842 = vmatmul.mubr.bf16.gmra.mrb[0].mxu0 %v751
    %v843 = vpop.f32.mrb[0].mxu0
    %v844 = vadd.f32 %v696, %v843
    %v845 = vpop.f32.mrb[0].mxu0
    %v846 = vpop.f32.mrb[0].mxu0
    %v847 = vadd.f32 %v701, %v846
    %v848 = vpop.f32.mrb[0].mxu0
    %849 = vmatprep.mubr.bf16.mxu0 0
    %850 = vmatmul.mubr.bf16.gmra.mrb[0].mxu0 %v752
    %v851 = vpop.f32.mrb[0].mxu0
    %v852 = vadd.f32 %v706, %v851
    %v853 = vpop.f32.mrb[0].mxu0
    %v854 = vpop.f32.mrb[0].mxu0
    %v855 = vadd.f32 %v711, %v854
    %v856 = vpop.f32.mrb[0].mxu0
    %857 = vdwg.mxu0
    %v858 = vadd.f32 %v247, %v796
    %v859 = vadd.f32 %v250, %v799
    %v860 = vadd.f32 %v255, %v804
    %v861 = vadd.f32 %v258, %v807
    %v862 = vadd.f32 %v263, %v812
    %v863 = vadd.f32 %v266, %v815
    %v864 = vadd.f32 %v271, %v820
    %v865 = vadd.f32 %v274, %v823
    %v866 = vadd.f32 %v279, %v828
    %v867 = vadd.f32 %v282, %v831
    %v868 = vadd.f32 %v287, %v836
    %v869 = vadd.f32 %v290, %v839
    %v870 = vadd.f32 %v295, %v844
    %v871 = vadd.f32 %v298, %v847
    %v872 = vadd.f32 %v303, %v852
    %v873 = vadd.f32 %v306, %v855
    %v874 = vmax.f32 %v858, 0.0
    %v875 = vmax.f32 %v859, 0.0
    %v876 = vmax.f32 %v860, 0.0
    %v877 = vmax.f32 %v861, 0.0
    %v878 = vmax.f32 %v862, 0.0
    %v879 = vmax.f32 %v863, 0.0
    %v880 = vmax.f32 %v864, 0.0
    %v881 = vmax.f32 %v865, 0.0
    %v882 = vmax.f32 %v866, 0.0
    %v883 = vmax.f32 %v867, 0.0
    %v884 = vmax.f32 %v868, 0.0
    %v885 = vmax.f32 %v869, 0.0
    %v886 = vmax.f32 %v870, 0.0
    %v887 = vmax.f32 %v871, 0.0
    %v888 = vmax.f32 %v872, 0.0
    %v889 = vmax.f32 %v873, 0.0
    %s890 = scalar_lea.vmem %s2, 128
    %v891 = vld [vmem:[%s890] sm:$0xf]
    %v892 = vld [vmem:[%s890 + $0x4] sm:$0xf]
    %v893 = vld [vmem:[%s890 + $0x8] sm:$0xf]
    %v894 = vld [vmem:[%s890 + $0xc] sm:$0xf]
    %v895 = vld [vmem:[%s890 + $0x10] sm:$0xf]
    %v896 = vld [vmem:[%s890 + $0x14] sm:$0xf]
    %v897 = vld [vmem:[%s890 + $0x18] sm:$0xf]
    %v898 = vld [vmem:[%s890 + $0x1c] sm:$0xf]
    %v899 = vld [vmem:[%s890 + $0x20] sm:$0xf]
    %v900 = vld [vmem:[%s890 + $0x24] sm:$0xf]
    %v901 = vld [vmem:[%s890 + $0x28] sm:$0xf]
    %v902 = vld [vmem:[%s890 + $0x2c] sm:$0xf]
    %v903 = vld [vmem:[%s890 + $0x30] sm:$0xf]
    %v904 = vld [vmem:[%s890 + $0x34] sm:$0xf]
    %v905 = vld [vmem:[%s890 + $0x38] sm:$0xf]
    %v906 = vld [vmem:[%s890 + $0x3c] sm:$0xf]
    %v907 = vpack.c.bf16 %v875, %v874
    %v908 = vpack.c.bf16 %v877, %v876
    %v909 = vpack.c.bf16 %v879, %v878
    %v910 = vpack.c.bf16 %v881, %v880
    %v911 = vpack.c.bf16 %v883, %v882
    %v912 = vpack.c.bf16 %v885, %v884
    %v913 = vpack.c.bf16 %v887, %v886
    %v914 = vpack.c.bf16 %v889, %v888
    %s915 = scalar_lea.vmem %s3, 384
    %v916 = vld [vmem:[%s915] sm:$0xff]
    %v917 = vld [vmem:[%s915 + $0x8] sm:$0xff]
    %v918 = vld [vmem:[%s915 + $0x10] sm:$0xff]
    %v919 = vld [vmem:[%s915 + $0x18] sm:$0xff]
    %v920 = vld [vmem:[%s915 + $0x20] sm:$0xff]
    %v921 = vld [vmem:[%s915 + $0x28] sm:$0xff]
    %v922 = vld [vmem:[%s915 + $0x30] sm:$0xff]
    %v923 = vld [vmem:[%s915 + $0x38] sm:$0xff]
    %v924 = vld [vmem:[%s915 + $0x40] sm:$0xff]
    %v925 = vld [vmem:[%s915 + $0x48] sm:$0xff]
    %v926 = vld [vmem:[%s915 + $0x50] sm:$0xff]
    %v927 = vld [vmem:[%s915 + $0x58] sm:$0xff]
    %v928 = vld [vmem:[%s915 + $0x60] sm:$0xff]
    %v929 = vld [vmem:[%s915 + $0x68] sm:$0xff]
    %v930 = vld [vmem:[%s915 + $0x70] sm:$0xff]
    %v931 = vld [vmem:[%s915 + $0x78] sm:$0xff]
    %933 = vset.pattern.permute.xlu0 0
    %934 = vperm.xlu0 %933, %v916
    %v935 = vpop.permute.xlu0 %934
    %938 = vset.pattern.permute.xlu0 0
    %939 = vperm.xlu0 %938, %v917
    %v940 = vpop.permute.xlu0 %939
    %943 = vset.pattern.permute.xlu0 0
    %944 = vperm.xlu0 %943, %v918
    %v945 = vpop.permute.xlu0 %944
    %948 = vset.pattern.permute.xlu0 0
    %949 = vperm.xlu0 %948, %v919
    %v950 = vpop.permute.xlu0 %949
    %953 = vset.pattern.permute.xlu0 0
    %954 = vperm.xlu0 %953, %v920
    %v955 = vpop.permute.xlu0 %954
    %958 = vset.pattern.permute.xlu0 0
    %959 = vperm.xlu0 %958, %v921
    %v960 = vpop.permute.xlu0 %959
    %963 = vset.pattern.permute.xlu0 0
    %964 = vperm.xlu0 %963, %v922
    %v965 = vpop.permute.xlu0 %964
    %968 = vset.pattern.permute.xlu0 0
    %969 = vperm.xlu0 %968, %v923
    %v970 = vpop.permute.xlu0 %969
    %973 = vset.pattern.permute.xlu0 0
    %974 = vperm.xlu0 %973, %v924
    %v975 = vpop.permute.xlu0 %974
    %978 = vset.pattern.permute.xlu0 0
    %979 = vperm.xlu0 %978, %v925
    %v980 = vpop.permute.xlu0 %979
    %983 = vset.pattern.permute.xlu0 0
    %984 = vperm.xlu0 %983, %v926
    %v985 = vpop.permute.xlu0 %984
    %988 = vset.pattern.permute.xlu0 0
    %989 = vperm.xlu0 %988, %v927
    %v990 = vpop.permute.xlu0 %989
    %993 = vset.pattern.permute.xlu0 0
    %994 = vperm.xlu0 %993, %v928
    %v995 = vpop.permute.xlu0 %994
    %998 = vset.pattern.permute.xlu0 0
    %999 = vperm.xlu0 %998, %v929
    %v1000 = vpop.permute.xlu0 %999
    %1003 = vset.pattern.permute.xlu0 0
    %1004 = vperm.xlu0 %1003, %v930
    %v1005 = vpop.permute.xlu0 %1004
    %1008 = vset.pattern.permute.xlu0 0
    %1009 = vperm.xlu0 %1008, %v931
    %v1010 = vpop.permute.xlu0 %1009
    %v1028 = vunpack.c.l.b16 %v891
    %v1029 = vunpack.c.l.b16 %v892
    %v1030 = vunpack.c.l.b16 %v893
    %v1031 = vunpack.c.l.b16 %v894
    %v1032 = vunpack.c.l.b16 %v895
    %v1033 = vunpack.c.l.b16 %v896
    %v1034 = vunpack.c.l.b16 %v897
    %v1035 = vunpack.c.l.b16 %v898
    %v1036 = vunpack.c.l.b16 %v899
    %v1037 = vunpack.c.l.b16 %v900
    %v1038 = vunpack.c.l.b16 %v901
    %v1039 = vunpack.c.l.b16 %v902
    %v1040 = vunpack.c.l.b16 %v903
    %v1041 = vunpack.c.l.b16 %v904
    %v1042 = vunpack.c.l.b16 %v905
    %v1043 = vunpack.c.l.b16 %v906
    %v1044 = vpack.c.b16 %v1029, %v1028
    %v1045 = vpack.c.b16 %v1031, %v1030
    %v1046 = vpack.c.b16 %v1033, %v1032
    %v1047 = vpack.c.b16 %v1035, %v1034
    %v1048 = vpack.c.b16 %v1037, %v1036
    %v1049 = vpack.c.b16 %v1039, %v1038
    %v1050 = vpack.c.b16 %v1041, %v1040
    %v1051 = vpack.c.b16 %v1043, %v1042
    %1060 = vmatprep.subr.bf16.mxu0 0
    %1061 = vmatpush1.bf16.msra.mxu0 %v907
    %1062 = vmatprep.subr.bf16.mxu0 0
    %1063 = vmatpush1.bf16.msra.mxu0 %v908
    %1064 = vmatprep.subr.bf16.mxu0 0
    %1065 = vmatpush1.bf16.msra.mxu0 %v909
    %1066 = vmatprep.subr.bf16.mxu0 0
    %1067 = vmatpush1.bf16.msra.mxu0 %v910
    %1068 = vmatprep.subr.bf16.mxu0 0
    %1069 = vmatpush1.bf16.msra.mxu0 %v911
    %1070 = vmatprep.subr.bf16.mxu0 0
    %1071 = vmatpush1.bf16.msra.mxu0 %v912
    %1072 = vmatprep.subr.bf16.mxu0 0
    %1073 = vmatpush1.bf16.msra.mxu0 %v913
    %1074 = vmatprep.subr.bf16.mxu0 0
    %1075 = vmatpush1.bf16.msra.mxu0 %v914
    %1076 = vmatprep.subr.bf16.mxu0 0
    %1077 = vmatpush1.bf16.msra.mxu0 0
    %1078 = vmatprep.subr.bf16.mxu0 0
    %1079 = vmatpush1.bf16.msra.mxu0 0
    %1080 = vmatprep.subr.bf16.mxu0 0
    %1081 = vmatpush1.bf16.msra.mxu0 0
    %1082 = vmatprep.subr.bf16.mxu0 0
    %1083 = vmatpush1.bf16.msra.mxu0 0
    %1084 = vmatprep.subr.bf16.mxu0 0
    %1085 = vmatpush1.bf16.msra.mxu0 0
    %1086 = vmatprep.subr.bf16.mxu0 0
    %1087 = vmatpush1.bf16.msra.mxu0 0
    %1088 = vmatprep.subr.bf16.mxu0 0
    %1089 = vmatpush1.bf16.msra.mxu0 0
    %1090 = vmatprep.subr.bf16.mxu0 0
    %1091 = vmatpush1.bf16.msra.mxu0 0
    %1092 = vmatprep.mubr.bf16.mxu0 0
    %1093 = vmatmul.mubr.bf16.gmra.mrb[0].mxu0 %v1044
    %v1094 = vpop.f32.mrb[0].mxu0
    %v1095 = vadd.f32 %v935, %v1094
    %v1096 = vpop.f32.mrb[0].mxu0
    %v1097 = vpop.f32.mrb[0].mxu0
    %v1098 = vadd.f32 %v940, %v1097
    %v1099 = vpop.f32.mrb[0].mxu0
    %1100 = vmatprep.mubr.bf16.mxu0 0
    %1101 = vmatmul.mubr.bf16.gmra.mrb[0].mxu0 %v1045
    %v1102 = vpop.f32.mrb[0].mxu0
    %v1103 = vadd.f32 %v945, %v1102
    %v1104 = vpop.f32.mrb[0].mxu0
    %v1105 = vpop.f32.mrb[0].mxu0
    %v1106 = vadd.f32 %v950, %v1105
    %v1107 = vpop.f32.mrb[0].mxu0
    %1108 = vmatprep.mubr.bf16.mxu0 0
    %1109 = vmatmul.mubr.bf16.gmra.mrb[0].mxu0 %v1046
    %v1110 = vpop.f32.mrb[0].mxu0
    %v1111 = vadd.f32 %v955, %v1110
    %v1112 = vpop.f32.mrb[0].mxu0
    %v1113 = vpop.f32.mrb[0].mxu0
    %v1114 = vadd.f32 %v960, %v1113
    %v1115 = vpop.f32.mrb[0].mxu0
    %1116 = vmatprep.mubr.bf16.mxu0 0
    %1117 = vmatmul.mubr.bf16.gmra.mrb[0].mxu0 %v1047
    %v1118 = vpop.f32.mrb[0].mxu0
    %v1119 = vadd.f32 %v965, %v1118
    %v1120 = vpop.f32.mrb[0].mxu0
    %v1121 = vpop.f32.mrb[0].mxu0
    %v1122 = vadd.f32 %v970, %v1121
    %v1123 = vpop.f32.mrb[0].mxu0
    %1124 = vmatprep.mubr.bf16.mxu0 0
    %1125 = vmatmul.mubr.bf16.gmra.mrb[0].mxu0 %v1048
    %v1126 = vpop.f32.mrb[0].mxu0
    %v1127 = vadd.f32 %v975, %v1126
    %v1128 = vpop.f32.mrb[0].mxu0
    %v1129 = vpop.f32.mrb[0].mxu0
    %v1130 = vadd.f32 %v980, %v1129
    %v1131 = vpop.f32.mrb[0].mxu0
    %1132 = vmatprep.mubr.bf16.mxu0 0
    %1133 = vmatmul.mubr.bf16.gmra.mrb[0].mxu0 %v1049
    %v1134 = vpop.f32.mrb[0].mxu0
    %v1135 = vadd.f32 %v985, %v1134
    %v1136 = vpop.f32.mrb[0].mxu0
    %v1137 = vpop.f32.mrb[0].mxu0
    %v1138 = vadd.f32 %v990, %v1137
    %v1139 = vpop.f32.mrb[0].mxu0
    %1140 = vmatprep.mubr.bf16.mxu0 0
    %1141 = vmatmul.mubr.bf16.gmra.mrb[0].mxu0 %v1050
    %v1142 = vpop.f32.mrb[0].mxu0
    %v1143 = vadd.f32 %v995, %v1142
    %v1144 = vpop.f32.mrb[0].mxu0
    %v1145 = vpop.f32.mrb[0].mxu0
    %v1146 = vadd.f32 %v1000, %v1145
    %v1147 = vpop.f32.mrb[0].mxu0
    %1148 = vmatprep.mubr.bf16.mxu0 0
    %1149 = vmatmul.mubr.bf16.gmra.mrb[0].mxu0 %v1051
    %v1150 = vpop.f32.mrb[0].mxu0
    %v1151 = vadd.f32 %v1005, %v1150
    %v1152 = vpop.f32.mrb[0].mxu0
    %v1153 = vpop.f32.mrb[0].mxu0
    %v1154 = vadd.f32 %v1010, %v1153
    %v1155 = vpop.f32.mrb[0].mxu0
    %1156 = vdwg.mxu0
    %v1157 = vmax.f32 %v1095, 0.0
    %v1158 = vmax.f32 %v1098, 0.0
    %v1159 = vmax.f32 %v1103, 0.0
    %v1160 = vmax.f32 %v1106, 0.0
    %v1161 = vmax.f32 %v1111, 0.0
    %v1162 = vmax.f32 %v1114, 0.0
    %v1163 = vmax.f32 %v1119, 0.0
    %v1164 = vmax.f32 %v1122, 0.0
    %v1165 = vmax.f32 %v1127, 0.0
    %v1166 = vmax.f32 %v1130, 0.0
    %v1167 = vmax.f32 %v1135, 0.0
    %v1168 = vmax.f32 %v1138, 0.0
    %v1169 = vmax.f32 %v1143, 0.0
    %v1170 = vmax.f32 %v1146, 0.0
    %v1171 = vmax.f32 %v1151, 0.0
    %v1172 = vmax.f32 %v1154, 0.0
    %s1173 = scalar_lea.vmem %s2, 192
    %v1174 = vld [vmem:[%s1173] sm:$0xf]
    %v1175 = vld [vmem:[%s1173 + $0x4] sm:$0xf]
    %v1176 = vld [vmem:[%s1173 + $0x8] sm:$0xf]
    %v1177 = vld [vmem:[%s1173 + $0xc] sm:$0xf]
    %v1178 = vld [vmem:[%s1173 + $0x10] sm:$0xf]
    %v1179 = vld [vmem:[%s1173 + $0x14] sm:$0xf]
    %v1180 = vld [vmem:[%s1173 + $0x18] sm:$0xf]
    %v1181 = vld [vmem:[%s1173 + $0x1c] sm:$0xf]
    %v1182 = vld [vmem:[%s1173 + $0x20] sm:$0xf]
    %v1183 = vld [vmem:[%s1173 + $0x24] sm:$0xf]
    %v1184 = vld [vmem:[%s1173 + $0x28] sm:$0xf]
    %v1185 = vld [vmem:[%s1173 + $0x2c] sm:$0xf]
    %v1186 = vld [vmem:[%s1173 + $0x30] sm:$0xf]
    %v1187 = vld [vmem:[%s1173 + $0x34] sm:$0xf]
    %v1188 = vld [vmem:[%s1173 + $0x38] sm:$0xf]
    %v1189 = vld [vmem:[%s1173 + $0x3c] sm:$0xf]
    %v1190 = vpack.c.bf16 %v1158, %v1157
    %v1191 = vpack.c.bf16 %v1160, %v1159
    %v1192 = vpack.c.bf16 %v1162, %v1161
    %v1193 = vpack.c.bf16 %v1164, %v1163
    %v1194 = vpack.c.bf16 %v1166, %v1165
    %v1195 = vpack.c.bf16 %v1168, %v1167
    %v1196 = vpack.c.bf16 %v1170, %v1169
    %v1197 = vpack.c.bf16 %v1172, %v1171
    %s1198 = scalar_lea.vmem %s3, 512
    %v1199 = vld [vmem:[%s1198] sm:$0xff]
    %v1200 = vld [vmem:[%s1198 + $0x8] sm:$0xff]
    %v1201 = vld [vmem:[%s1198 + $0x10] sm:$0xff]
    %v1202 = vld [vmem:[%s1198 + $0x18] sm:$0xff]
    %v1203 = vld [vmem:[%s1198 + $0x20] sm:$0xff]
    %v1204 = vld [vmem:[%s1198 + $0x28] sm:$0xff]
    %v1205 = vld [vmem:[%s1198 + $0x30] sm:$0xff]
    %v1206 = vld [vmem:[%s1198 + $0x38] sm:$0xff]
    %v1207 = vld [vmem:[%s1198 + $0x40] sm:$0xff]
    %v1208 = vld [vmem:[%s1198 + $0x48] sm:$0xff]
    %v1209 = vld [vmem:[%s1198 + $0x50] sm:$0xff]
    %v1210 = vld [vmem:[%s1198 + $0x58] sm:$0xff]
    %v1211 = vld [vmem:[%s1198 + $0x60] sm:$0xff]
    %v1212 = vld [vmem:[%s1198 + $0x68] sm:$0xff]
    %v1213 = vld [vmem:[%s1198 + $0x70] sm:$0xff]
    %v1214 = vld [vmem:[%s1198 + $0x78] sm:$0xff]
    %1216 = vset.pattern.permute.xlu0 0
    %1217 = vperm.xlu0 %1216, %v1199
    %v1218 = vpop.permute.xlu0 %1217
    %1221 = vset.pattern.permute.xlu0 0
    %1222 = vperm.xlu0 %1221, %v1200
    %v1223 = vpop.permute.xlu0 %1222
    %1226 = vset.pattern.permute.xlu0 0
    %1227 = vperm.xlu0 %1226, %v1201
    %v1228 = vpop.permute.xlu0 %1227
    %1231 = vset.pattern.permute.xlu0 0
    %1232 = vperm.xlu0 %1231, %v1202
    %v1233 = vpop.permute.xlu0 %1232
    %1236 = vset.pattern.permute.xlu0 0
    %1237 = vperm.xlu0 %1236, %v1203
    %v1238 = vpop.permute.xlu0 %1237
    %1241 = vset.pattern.permute.xlu0 0
    %1242 = vperm.xlu0 %1241, %v1204
    %v1243 = vpop.permute.xlu0 %1242
    %1246 = vset.pattern.permute.xlu0 0
    %1247 = vperm.xlu0 %1246, %v1205
    %v1248 = vpop.permute.xlu0 %1247
    %1251 = vset.pattern.permute.xlu0 0
    %1252 = vperm.xlu0 %1251, %v1206
    %v1253 = vpop.permute.xlu0 %1252
    %1256 = vset.pattern.permute.xlu0 0
    %1257 = vperm.xlu0 %1256, %v1207
    %v1258 = vpop.permute.xlu0 %1257
    %1261 = vset.pattern.permute.xlu0 0
    %1262 = vperm.xlu0 %1261, %v1208
    %v1263 = vpop.permute.xlu0 %1262
    %1266 = vset.pattern.permute.xlu0 0
    %1267 = vperm.xlu0 %1266, %v1209
    %v1268 = vpop.permute.xlu0 %1267
    %1271 = vset.pattern.permute.xlu0 0
    %1272 = vperm.xlu0 %1271, %v1210
    %v1273 = vpop.permute.xlu0 %1272
    %1276 = vset.pattern.permute.xlu0 0
    %1277 = vperm.xlu0 %1276, %v1211
    %v1278 = vpop.permute.xlu0 %1277
    %1281 = vset.pattern.permute.xlu0 0
    %1282 = vperm.xlu0 %1281, %v1212
    %v1283 = vpop.permute.xlu0 %1282
    %1286 = vset.pattern.permute.xlu0 0
    %1287 = vperm.xlu0 %1286, %v1213
    %v1288 = vpop.permute.xlu0 %1287
    %1291 = vset.pattern.permute.xlu0 0
    %1292 = vperm.xlu0 %1291, %v1214
    %v1293 = vpop.permute.xlu0 %1292
    %v1311 = vunpack.c.l.b16 %v1174
    %v1312 = vunpack.c.l.b16 %v1175
    %v1313 = vunpack.c.l.b16 %v1176
    %v1314 = vunpack.c.l.b16 %v1177
    %v1315 = vunpack.c.l.b16 %v1178
    %v1316 = vunpack.c.l.b16 %v1179
    %v1317 = vunpack.c.l.b16 %v1180
    %v1318 = vunpack.c.l.b16 %v1181
    %v1319 = vunpack.c.l.b16 %v1182
    %v1320 = vunpack.c.l.b16 %v1183
    %v1321 = vunpack.c.l.b16 %v1184
    %v1322 = vunpack.c.l.b16 %v1185
    %v1323 = vunpack.c.l.b16 %v1186
    %v1324 = vunpack.c.l.b16 %v1187
    %v1325 = vunpack.c.l.b16 %v1188
    %v1326 = vunpack.c.l.b16 %v1189
    %v1327 = vpack.c.b16 %v1312, %v1311
    %v1328 = vpack.c.b16 %v1314, %v1313
    %v1329 = vpack.c.b16 %v1316, %v1315
    %v1330 = vpack.c.b16 %v1318, %v1317
    %v1331 = vpack.c.b16 %v1320, %v1319
    %v1332 = vpack.c.b16 %v1322, %v1321
    %v1333 = vpack.c.b16 %v1324, %v1323
    %v1334 = vpack.c.b16 %v1326, %v1325
    %1343 = vmatprep.subr.bf16.mxu0 0
    %1344 = vmatpush1.bf16.msra.mxu0 %v1190
    %1345 = vmatprep.subr.bf16.mxu0 0
    %1346 = vmatpush1.bf16.msra.mxu0 %v1191
    %1347 = vmatprep.subr.bf16.mxu0 0
    %1348 = vmatpush1.bf16.msra.mxu0 %v1192
    %1349 = vmatprep.subr.bf16.mxu0 0
    %1350 = vmatpush1.bf16.msra.mxu0 %v1193
    %1351 = vmatprep.subr.bf16.mxu0 0
    %1352 = vmatpush1.bf16.msra.mxu0 %v1194
    %1353 = vmatprep.subr.bf16.mxu0 0
    %1354 = vmatpush1.bf16.msra.mxu0 %v1195
    %1355 = vmatprep.subr.bf16.mxu0 0
    %1356 = vmatpush1.bf16.msra.mxu0 %v1196
    %1357 = vmatprep.subr.bf16.mxu0 0
    %1358 = vmatpush1.bf16.msra.mxu0 %v1197
    %1359 = vmatprep.subr.bf16.mxu0 0
    %1360 = vmatpush1.bf16.msra.mxu0 0
    %1361 = vmatprep.subr.bf16.mxu0 0
    %1362 = vmatpush1.bf16.msra.mxu0 0
    %1363 = vmatprep.subr.bf16.mxu0 0
    %1364 = vmatpush1.bf16.msra.mxu0 0
    %1365 = vmatprep.subr.bf16.mxu0 0
    %1366 = vmatpush1.bf16.msra.mxu0 0
    %1367 = vmatprep.subr.bf16.mxu0 0
    %1368 = vmatpush1.bf16.msra.mxu0 0
    %1369 = vmatprep.subr.bf16.mxu0 0
    %1370 = vmatpush1.bf16.msra.mxu0 0
    %1371 = vmatprep.subr.bf16.mxu0 0
    %1372 = vmatpush1.bf16.msra.mxu0 0
    %1373 = vmatprep.subr.bf16.mxu0 0
    %1374 = vmatpush1.bf16.msra.mxu0 0
    %1375 = vmatprep.mubr.bf16.mxu0 0
    %1376 = vmatmul.mubr.bf16.gmra.mrb[0].mxu0 %v1327
    %v1377 = vpop.f32.mrb[0].mxu0
    %v1378 = vadd.f32 %v1218, %v1377
    %v1379 = vpop.f32.mrb[0].mxu0
    %v1380 = vpop.f32.mrb[0].mxu0
    %v1381 = vadd.f32 %v1223, %v1380
    %v1382 = vpop.f32.mrb[0].mxu0
    %1383 = vmatprep.mubr.bf16.mxu0 0
    %1384 = vmatmul.mubr.bf16.gmra.mrb[0].mxu0 %v1328
    %v1385 = vpop.f32.mrb[0].mxu0
    %v1386 = vadd.f32 %v1228, %v1385
    %v1387 = vpop.f32.mrb[0].mxu0
    %v1388 = vpop.f32.mrb[0].mxu0
    %v1389 = vadd.f32 %v1233, %v1388
    %v1390 = vpop.f32.mrb[0].mxu0
    %1391 = vmatprep.mubr.bf16.mxu0 0
    %1392 = vmatmul.mubr.bf16.gmra.mrb[0].mxu0 %v1329
    %v1393 = vpop.f32.mrb[0].mxu0
    %v1394 = vadd.f32 %v1238, %v1393
    %v1395 = vpop.f32.mrb[0].mxu0
    %v1396 = vpop.f32.mrb[0].mxu0
    %v1397 = vadd.f32 %v1243, %v1396
    %v1398 = vpop.f32.mrb[0].mxu0
    %1399 = vmatprep.mubr.bf16.mxu0 0
    %1400 = vmatmul.mubr.bf16.gmra.mrb[0].mxu0 %v1330
    %v1401 = vpop.f32.mrb[0].mxu0
    %v1402 = vadd.f32 %v1248, %v1401
    %v1403 = vpop.f32.mrb[0].mxu0
    %v1404 = vpop.f32.mrb[0].mxu0
    %v1405 = vadd.f32 %v1253, %v1404
    %v1406 = vpop.f32.mrb[0].mxu0
    %1407 = vmatprep.mubr.bf16.mxu0 0
    %1408 = vmatmul.mubr.bf16.gmra.mrb[0].mxu0 %v1331
    %v1409 = vpop.f32.mrb[0].mxu0
    %v1410 = vadd.f32 %v1258, %v1409
    %v1411 = vpop.f32.mrb[0].mxu0
    %v1412 = vpop.f32.mrb[0].mxu0
    %v1413 = vadd.f32 %v1263, %v1412
    %v1414 = vpop.f32.mrb[0].mxu0
    %1415 = vmatprep.mubr.bf16.mxu0 0
    %1416 = vmatmul.mubr.bf16.gmra.mrb[0].mxu0 %v1332
    %v1417 = vpop.f32.mrb[0].mxu0
    %v1418 = vadd.f32 %v1268, %v1417
    %v1419 = vpop.f32.mrb[0].mxu0
    %v1420 = vpop.f32.mrb[0].mxu0
    %v1421 = vadd.f32 %v1273, %v1420
    %v1422 = vpop.f32.mrb[0].mxu0
    %1423 = vmatprep.mubr.bf16.mxu0 0
    %1424 = vmatmul.mubr.bf16.gmra.mrb[0].mxu0 %v1333
    %v1425 = vpop.f32.mrb[0].mxu0
    %v1426 = vadd.f32 %v1278, %v1425
    %v1427 = vpop.f32.mrb[0].mxu0
    %v1428 = vpop.f32.mrb[0].mxu0
    %v1429 = vadd.f32 %v1283, %v1428
    %v1430 = vpop.f32.mrb[0].mxu0
    %1431 = vmatprep.mubr.bf16.mxu0 0
    %1432 = vmatmul.mubr.bf16.gmra.mrb[0].mxu0 %v1334
    %v1433 = vpop.f32.mrb[0].mxu0
    %v1434 = vadd.f32 %v1288, %v1433
    %v1435 = vpop.f32.mrb[0].mxu0
    %v1436 = vpop.f32.mrb[0].mxu0
    %v1437 = vadd.f32 %v1293, %v1436
    %v1438 = vpop.f32.mrb[0].mxu0
    %1439 = vdwg.mxu0
    %v1440 = vadd.f32 %v874, %v1378
    %v1441 = vadd.f32 %v875, %v1381
    %v1442 = vadd.f32 %v876, %v1386
    %v1443 = vadd.f32 %v877, %v1389
    %v1444 = vadd.f32 %v878, %v1394
    %v1445 = vadd.f32 %v879, %v1397
    %v1446 = vadd.f32 %v880, %v1402
    %v1447 = vadd.f32 %v881, %v1405
    %v1448 = vadd.f32 %v882, %v1410
    %v1449 = vadd.f32 %v883, %v1413
    %v1450 = vadd.f32 %v884, %v1418
    %v1451 = vadd.f32 %v885, %v1421
    %v1452 = vadd.f32 %v886, %v1426
    %v1453 = vadd.f32 %v887, %v1429
    %v1454 = vadd.f32 %v888, %v1434
    %v1455 = vadd.f32 %v889, %v1437
    %v1456 = vmax.f32 %v1440, 0.0
    %v1457 = vmax.f32 %v1441, 0.0
    %v1458 = vmax.f32 %v1442, 0.0
    %v1459 = vmax.f32 %v1443, 0.0
    %v1460 = vmax.f32 %v1444, 0.0
    %v1461 = vmax.f32 %v1445, 0.0
    %v1462 = vmax.f32 %v1446, 0.0
    %v1463 = vmax.f32 %v1447, 0.0
    %v1464 = vmax.f32 %v1448, 0.0
    %v1465 = vmax.f32 %v1449, 0.0
    %v1466 = vmax.f32 %v1450, 0.0
    %v1467 = vmax.f32 %v1451, 0.0
    %v1468 = vmax.f32 %v1452, 0.0
    %v1469 = vmax.f32 %v1453, 0.0
    %v1470 = vmax.f32 %v1454, 0.0
    %v1471 = vmax.f32 %v1455, 0.0
    %s1472 = scalar_lea.vmem %s2, 256
    %v1473 = vld [vmem:[%s1472] sm:$0xf]
    %v1474 = vld [vmem:[%s1472 + $0x4] sm:$0xf]
    %v1475 = vld [vmem:[%s1472 + $0x8] sm:$0xf]
    %v1476 = vld [vmem:[%s1472 + $0xc] sm:$0xf]
    %v1477 = vld [vmem:[%s1472 + $0x10] sm:$0xf]
    %v1478 = vld [vmem:[%s1472 + $0x14] sm:$0xf]
    %v1479 = vld [vmem:[%s1472 + $0x18] sm:$0xf]
    %v1480 = vld [vmem:[%s1472 + $0x1c] sm:$0xf]
    %v1481 = vld [vmem:[%s1472 + $0x20] sm:$0xf]
    %v1482 = vld [vmem:[%s1472 + $0x24] sm:$0xf]
    %v1483 = vld [vmem:[%s1472 + $0x28] sm:$0xf]
    %v1484 = vld [vmem:[%s1472 + $0x2c] sm:$0xf]
    %v1485 = vld [vmem:[%s1472 + $0x30] sm:$0xf]
    %v1486 = vld [vmem:[%s1472 + $0x34] sm:$0xf]
    %v1487 = vld [vmem:[%s1472 + $0x38] sm:$0xf]
    %v1488 = vld [vmem:[%s1472 + $0x3c] sm:$0xf]
    %v1489 = vpack.c.bf16 %v1457, %v1456
    %v1490 = vpack.c.bf16 %v1459, %v1458
    %v1491 = vpack.c.bf16 %v1461, %v1460
    %v1492 = vpack.c.bf16 %v1463, %v1462
    %v1493 = vpack.c.bf16 %v1465, %v1464
    %v1494 = vpack.c.bf16 %v1467, %v1466
    %v1495 = vpack.c.bf16 %v1469, %v1468
    %v1496 = vpack.c.bf16 %v1471, %v1470
    %s1497 = scalar_lea.vmem %s3, 640
    %v1498 = vld [vmem:[%s1497] sm:$0xff]
    %v1499 = vld [vmem:[%s1497 + $0x8] sm:$0xff]
    %v1500 = vld [vmem:[%s1497 + $0x10] sm:$0xff]
    %v1501 = vld [vmem:[%s1497 + $0x18] sm:$0xff]
    %v1502 = vld [vmem:[%s1497 + $0x20] sm:$0xff]
    %v1503 = vld [vmem:[%s1497 + $0x28] sm:$0xff]
    %v1504 = vld [vmem:[%s1497 + $0x30] sm:$0xff]
    %v1505 = vld [vmem:[%s1497 + $0x38] sm:$0xff]
    %v1506 = vld [vmem:[%s1497 + $0x40] sm:$0xff]
    %v1507 = vld [vmem:[%s1497 + $0x48] sm:$0xff]
    %v1508 = vld [vmem:[%s1497 + $0x50] sm:$0xff]
    %v1509 = vld [vmem:[%s1497 + $0x58] sm:$0xff]
    %v1510 = vld [vmem:[%s1497 + $0x60] sm:$0xff]
    %v1511 = vld [vmem:[%s1497 + $0x68] sm:$0xff]
    %v1512 = vld [vmem:[%s1497 + $0x70] sm:$0xff]
    %v1513 = vld [vmem:[%s1497 + $0x78] sm:$0xff]
    %1515 = vset.pattern.permute.xlu0 0
    %1516 = vperm.xlu0 %1515, %v1498
    %v1517 = vpop.permute.xlu0 %1516
    %1520 = vset.pattern.permute.xlu0 0
    %1521 = vperm.xlu0 %1520, %v1499
    %v1522 = vpop.permute.xlu0 %1521
    %1525 = vset.pattern.permute.xlu0 0
    %1526 = vperm.xlu0 %1525, %v1500
    %v1527 = vpop.permute.xlu0 %1526
    %1530 = vset.pattern.permute.xlu0 0
    %1531 = vperm.xlu0 %1530, %v1501
    %v1532 = vpop.permute.xlu0 %1531
    %1535 = vset.pattern.permute.xlu0 0
    %1536 = vperm.xlu0 %1535, %v1502
    %v1537 = vpop.permute.xlu0 %1536
    %1540 = vset.pattern.permute.xlu0 0
    %1541 = vperm.xlu0 %1540, %v1503
    %v1542 = vpop.permute.xlu0 %1541
    %1545 = vset.pattern.permute.xlu0 0
    %1546 = vperm.xlu0 %1545, %v1504
    %v1547 = vpop.permute.xlu0 %1546
    %1550 = vset.pattern.permute.xlu0 0
    %1551 = vperm.xlu0 %1550, %v1505
    %v1552 = vpop.permute.xlu0 %1551
    %1555 = vset.pattern.permute.xlu0 0
    %1556 = vperm.xlu0 %1555, %v1506
    %v1557 = vpop.permute.xlu0 %1556
    %1560 = vset.pattern.permute.xlu0 0
    %1561 = vperm.xlu0 %1560, %v1507
    %v1562 = vpop.permute.xlu0 %1561
    %1565 = vset.pattern.permute.xlu0 0
    %1566 = vperm.xlu0 %1565, %v1508
    %v1567 = vpop.permute.xlu0 %1566
    %1570 = vset.pattern.permute.xlu0 0
    %1571 = vperm.xlu0 %1570, %v1509
    %v1572 = vpop.permute.xlu0 %1571
    %1575 = vset.pattern.permute.xlu0 0
    %1576 = vperm.xlu0 %1575, %v1510
    %v1577 = vpop.permute.xlu0 %1576
    %1580 = vset.pattern.permute.xlu0 0
    %1581 = vperm.xlu0 %1580, %v1511
    %v1582 = vpop.permute.xlu0 %1581
    %1585 = vset.pattern.permute.xlu0 0
    %1586 = vperm.xlu0 %1585, %v1512
    %v1587 = vpop.permute.xlu0 %1586
    %1590 = vset.pattern.permute.xlu0 0
    %1591 = vperm.xlu0 %1590, %v1513
    %v1592 = vpop.permute.xlu0 %1591
    %v1610 = vunpack.c.l.b16 %v1473
    %v1611 = vunpack.c.l.b16 %v1474
    %v1612 = vunpack.c.l.b16 %v1475
    %v1613 = vunpack.c.l.b16 %v1476
    %v1614 = vunpack.c.l.b16 %v1477
    %v1615 = vunpack.c.l.b16 %v1478
    %v1616 = vunpack.c.l.b16 %v1479
    %v1617 = vunpack.c.l.b16 %v1480
    %v1618 = vunpack.c.l.b16 %v1481
    %v1619 = vunpack.c.l.b16 %v1482
    %v1620 = vunpack.c.l.b16 %v1483
    %v1621 = vunpack.c.l.b16 %v1484
    %v1622 = vunpack.c.l.b16 %v1485
    %v1623 = vunpack.c.l.b16 %v1486
    %v1624 = vunpack.c.l.b16 %v1487
    %v1625 = vunpack.c.l.b16 %v1488
    %v1626 = vpack.c.b16 %v1611, %v1610
    %v1627 = vpack.c.b16 %v1613, %v1612
    %v1628 = vpack.c.b16 %v1615, %v1614
    %v1629 = vpack.c.b16 %v1617, %v1616
    %v1630 = vpack.c.b16 %v1619, %v1618
    %v1631 = vpack.c.b16 %v1621, %v1620
    %v1632 = vpack.c.b16 %v1623, %v1622
    %v1633 = vpack.c.b16 %v1625, %v1624
    %1642 = vmatprep.subr.bf16.mxu0 0
    %1643 = vmatpush1.bf16.msra.mxu0 %v1489
    %1644 = vmatprep.subr.bf16.mxu0 0
    %1645 = vmatpush1.bf16.msra.mxu0 %v1490
    %1646 = vmatprep.subr.bf16.mxu0 0
    %1647 = vmatpush1.bf16.msra.mxu0 %v1491
    %1648 = vmatprep.subr.bf16.mxu0 0
    %1649 = vmatpush1.bf16.msra.mxu0 %v1492
    %1650 = vmatprep.subr.bf16.mxu0 0
    %1651 = vmatpush1.bf16.msra.mxu0 %v1493
    %1652 = vmatprep.subr.bf16.mxu0 0
    %1653 = vmatpush1.bf16.msra.mxu0 %v1494
    %1654 = vmatprep.subr.bf16.mxu0 0
    %1655 = vmatpush1.bf16.msra.mxu0 %v1495
    %1656 = vmatprep.subr.bf16.mxu0 0
    %1657 = vmatpush1.bf16.msra.mxu0 %v1496
    %1658 = vmatprep.subr.bf16.mxu0 0
    %1659 = vmatpush1.bf16.msra.mxu0 0
    %1660 = vmatprep.subr.bf16.mxu0 0
    %1661 = vmatpush1.bf16.msra.mxu0 0
    %1662 = vmatprep.subr.bf16.mxu0 0
    %1663 = vmatpush1.bf16.msra.mxu0 0
    %1664 = vmatprep.subr.bf16.mxu0 0
    %1665 = vmatpush1.bf16.msra.mxu0 0
    %1666 = vmatprep.subr.bf16.mxu0 0
    %1667 = vmatpush1.bf16.msra.mxu0 0
    %1668 = vmatprep.subr.bf16.mxu0 0
    %1669 = vmatpush1.bf16.msra.mxu0 0
    %1670 = vmatprep.subr.bf16.mxu0 0
    %1671 = vmatpush1.bf16.msra.mxu0 0
    %1672 = vmatprep.subr.bf16.mxu0 0
    %1673 = vmatpush1.bf16.msra.mxu0 0
    %1674 = vmatprep.mubr.bf16.mxu0 0
    %1675 = vmatmul.mubr.bf16.gmra.mrb[0].mxu0 %v1626
    %v1676 = vpop.f32.mrb[0].mxu0
    %v1677 = vadd.f32 %v1517, %v1676
    %v1678 = vpop.f32.mrb[0].mxu0
    %v1679 = vpop.f32.mrb[0].mxu0
    %v1680 = vadd.f32 %v1522, %v1679
    %v1681 = vpop.f32.mrb[0].mxu0
    %1682 = vmatprep.mubr.bf16.mxu0 0
    %1683 = vmatmul.mubr.bf16.gmra.mrb[0].mxu0 %v1627
    %v1684 = vpop.f32.mrb[0].mxu0
    %v1685 = vadd.f32 %v1527, %v1684
    %v1686 = vpop.f32.mrb[0].mxu0
    %v1687 = vpop.f32.mrb[0].mxu0
    %v1688 = vadd.f32 %v1532, %v1687
    %v1689 = vpop.f32.mrb[0].mxu0
    %1690 = vmatprep.mubr.bf16.mxu0 0
    %1691 = vmatmul.mubr.bf16.gmra.mrb[0].mxu0 %v1628
    %v1692 = vpop.f32.mrb[0].mxu0
    %v1693 = vadd.f32 %v1537, %v1692
    %v1694 = vpop.f32.mrb[0].mxu0
    %v1695 = vpop.f32.mrb[0].mxu0
    %v1696 = vadd.f32 %v1542, %v1695
    %v1697 = vpop.f32.mrb[0].mxu0
    %1698 = vmatprep.mubr.bf16.mxu0 0
    %1699 = vmatmul.mubr.bf16.gmra.mrb[0].mxu0 %v1629
    %v1700 = vpop.f32.mrb[0].mxu0
    %v1701 = vadd.f32 %v1547, %v1700
    %v1702 = vpop.f32.mrb[0].mxu0
    %v1703 = vpop.f32.mrb[0].mxu0
    %v1704 = vadd.f32 %v1552, %v1703
    %v1705 = vpop.f32.mrb[0].mxu0
    %1706 = vmatprep.mubr.bf16.mxu0 0
    %1707 = vmatmul.mubr.bf16.gmra.mrb[0].mxu0 %v1630
    %v1708 = vpop.f32.mrb[0].mxu0
    %v1709 = vadd.f32 %v1557, %v1708
    %v1710 = vpop.f32.mrb[0].mxu0
    %v1711 = vpop.f32.mrb[0].mxu0
    %v1712 = vadd.f32 %v1562, %v1711
    %v1713 = vpop.f32.mrb[0].mxu0
    %1714 = vmatprep.mubr.bf16.mxu0 0
    %1715 = vmatmul.mubr.bf16.gmra.mrb[0].mxu0 %v1631
    %v1716 = vpop.f32.mrb[0].mxu0
    %v1717 = vadd.f32 %v1567, %v1716
    %v1718 = vpop.f32.mrb[0].mxu0
    %v1719 = vpop.f32.mrb[0].mxu0
    %v1720 = vadd.f32 %v1572, %v1719
    %v1721 = vpop.f32.mrb[0].mxu0
    %1722 = vmatprep.mubr.bf16.mxu0 0
    %1723 = vmatmul.mubr.bf16.gmra.mrb[0].mxu0 %v1632
    %v1724 = vpop.f32.mrb[0].mxu0
    %v1725 = vadd.f32 %v1577, %v1724
    %v1726 = vpop.f32.mrb[0].mxu0
    %v1727 = vpop.f32.mrb[0].mxu0
    %v1728 = vadd.f32 %v1582, %v1727
    %v1729 = vpop.f32.mrb[0].mxu0
    %1730 = vmatprep.mubr.bf16.mxu0 0
    %1731 = vmatmul.mubr.bf16.gmra.mrb[0].mxu0 %v1633
    %v1732 = vpop.f32.mrb[0].mxu0
    %v1733 = vadd.f32 %v1587, %v1732
    %v1734 = vpop.f32.mrb[0].mxu0
    %v1735 = vpop.f32.mrb[0].mxu0
    %v1736 = vadd.f32 %v1592, %v1735
    %v1737 = vpop.f32.mrb[0].mxu0
    %1738 = vdwg.mxu0
    %v1739 = vmax.f32 %v1677, 0.0
    %v1740 = vmax.f32 %v1680, 0.0
    %v1741 = vmax.f32 %v1685, 0.0
    %v1742 = vmax.f32 %v1688, 0.0
    %v1743 = vmax.f32 %v1693, 0.0
    %v1744 = vmax.f32 %v1696, 0.0
    %v1745 = vmax.f32 %v1701, 0.0
    %v1746 = vmax.f32 %v1704, 0.0
    %v1747 = vmax.f32 %v1709, 0.0
    %v1748 = vmax.f32 %v1712, 0.0
    %v1749 = vmax.f32 %v1717, 0.0
    %v1750 = vmax.f32 %v1720, 0.0
    %v1751 = vmax.f32 %v1725, 0.0
    %v1752 = vmax.f32 %v1728, 0.0
    %v1753 = vmax.f32 %v1733, 0.0
    %v1754 = vmax.f32 %v1736, 0.0
    %s1755 = scalar_lea.vmem %s2, 320
    %v1756 = vld [vmem:[%s1755] sm:$0xf]
    %v1757 = vld [vmem:[%s1755 + $0x4] sm:$0xf]
    %v1758 = vld [vmem:[%s1755 + $0x8] sm:$0xf]
    %v1759 = vld [vmem:[%s1755 + $0xc] sm:$0xf]
    %v1760 = vld [vmem:[%s1755 + $0x10] sm:$0xf]
    %v1761 = vld [vmem:[%s1755 + $0x14] sm:$0xf]
    %v1762 = vld [vmem:[%s1755 + $0x18] sm:$0xf]
    %v1763 = vld [vmem:[%s1755 + $0x1c] sm:$0xf]
    %v1764 = vld [vmem:[%s1755 + $0x20] sm:$0xf]
    %v1765 = vld [vmem:[%s1755 + $0x24] sm:$0xf]
    %v1766 = vld [vmem:[%s1755 + $0x28] sm:$0xf]
    %v1767 = vld [vmem:[%s1755 + $0x2c] sm:$0xf]
    %v1768 = vld [vmem:[%s1755 + $0x30] sm:$0xf]
    %v1769 = vld [vmem:[%s1755 + $0x34] sm:$0xf]
    %v1770 = vld [vmem:[%s1755 + $0x38] sm:$0xf]
    %v1771 = vld [vmem:[%s1755 + $0x3c] sm:$0xf]
    %v1772 = vpack.c.bf16 %v1740, %v1739
    %v1773 = vpack.c.bf16 %v1742, %v1741
    %v1774 = vpack.c.bf16 %v1744, %v1743
    %v1775 = vpack.c.bf16 %v1746, %v1745
    %v1776 = vpack.c.bf16 %v1748, %v1747
    %v1777 = vpack.c.bf16 %v1750, %v1749
    %v1778 = vpack.c.bf16 %v1752, %v1751
    %v1779 = vpack.c.bf16 %v1754, %v1753
    %s1780 = scalar_lea.vmem %s3, 768
    %v1781 = vld [vmem:[%s1780] sm:$0xff]
    %v1782 = vld [vmem:[%s1780 + $0x8] sm:$0xff]
    %v1783 = vld [vmem:[%s1780 + $0x10] sm:$0xff]
    %v1784 = vld [vmem:[%s1780 + $0x18] sm:$0xff]
    %v1785 = vld [vmem:[%s1780 + $0x20] sm:$0xff]
    %v1786 = vld [vmem:[%s1780 + $0x28] sm:$0xff]
    %v1787 = vld [vmem:[%s1780 + $0x30] sm:$0xff]
    %v1788 = vld [vmem:[%s1780 + $0x38] sm:$0xff]
    %v1789 = vld [vmem:[%s1780 + $0x40] sm:$0xff]
    %v1790 = vld [vmem:[%s1780 + $0x48] sm:$0xff]
    %v1791 = vld [vmem:[%s1780 + $0x50] sm:$0xff]
    %v1792 = vld [vmem:[%s1780 + $0x58] sm:$0xff]
    %v1793 = vld [vmem:[%s1780 + $0x60] sm:$0xff]
    %v1794 = vld [vmem:[%s1780 + $0x68] sm:$0xff]
    %v1795 = vld [vmem:[%s1780 + $0x70] sm:$0xff]
    %v1796 = vld [vmem:[%s1780 + $0x78] sm:$0xff]
    %1798 = vset.pattern.permute.xlu0 0
    %1799 = vperm.xlu0 %1798, %v1781
    %v1800 = vpop.permute.xlu0 %1799
    %1803 = vset.pattern.permute.xlu0 0
    %1804 = vperm.xlu0 %1803, %v1782
    %v1805 = vpop.permute.xlu0 %1804
    %1808 = vset.pattern.permute.xlu0 0
    %1809 = vperm.xlu0 %1808, %v1783
    %v1810 = vpop.permute.xlu0 %1809
    %1813 = vset.pattern.permute.xlu0 0
    %1814 = vperm.xlu0 %1813, %v1784
    %v1815 = vpop.permute.xlu0 %1814
    %1818 = vset.pattern.permute.xlu0 0
    %1819 = vperm.xlu0 %1818, %v1785
    %v1820 = vpop.permute.xlu0 %1819
    %1823 = vset.pattern.permute.xlu0 0
    %1824 = vperm.xlu0 %1823, %v1786
    %v1825 = vpop.permute.xlu0 %1824
    %1828 = vset.pattern.permute.xlu0 0
    %1829 = vperm.xlu0 %1828, %v1787
    %v1830 = vpop.permute.xlu0 %1829
    %1833 = vset.pattern.permute.xlu0 0
    %1834 = vperm.xlu0 %1833, %v1788
    %v1835 = vpop.permute.xlu0 %1834
    %1838 = vset.pattern.permute.xlu0 0
    %1839 = vperm.xlu0 %1838, %v1789
    %v1840 = vpop.permute.xlu0 %1839
    %1843 = vset.pattern.permute.xlu0 0
    %1844 = vperm.xlu0 %1843, %v1790
    %v1845 = vpop.permute.xlu0 %1844
    %1848 = vset.pattern.permute.xlu0 0
    %1849 = vperm.xlu0 %1848, %v1791
    %v1850 = vpop.permute.xlu0 %1849
    %1853 = vset.pattern.permute.xlu0 0
    %1854 = vperm.xlu0 %1853, %v1792
    %v1855 = vpop.permute.xlu0 %1854
    %1858 = vset.pattern.permute.xlu0 0
    %1859 = vperm.xlu0 %1858, %v1793
    %v1860 = vpop.permute.xlu0 %1859
    %1863 = vset.pattern.permute.xlu0 0
    %1864 = vperm.xlu0 %1863, %v1794
    %v1865 = vpop.permute.xlu0 %1864
    %1868 = vset.pattern.permute.xlu0 0
    %1869 = vperm.xlu0 %1868, %v1795
    %v1870 = vpop.permute.xlu0 %1869
    %1873 = vset.pattern.permute.xlu0 0
    %1874 = vperm.xlu0 %1873, %v1796
    %v1875 = vpop.permute.xlu0 %1874
    %v1893 = vunpack.c.l.b16 %v1756
    %v1894 = vunpack.c.l.b16 %v1757
    %v1895 = vunpack.c.l.b16 %v1758
    %v1896 = vunpack.c.l.b16 %v1759
    %v1897 = vunpack.c.l.b16 %v1760
    %v1898 = vunpack.c.l.b16 %v1761
    %v1899 = vunpack.c.l.b16 %v1762
    %v1900 = vunpack.c.l.b16 %v1763
    %v1901 = vunpack.c.l.b16 %v1764
    %v1902 = vunpack.c.l.b16 %v1765
    %v1903 = vunpack.c.l.b16 %v1766
    %v1904 = vunpack.c.l.b16 %v1767
    %v1905 = vunpack.c.l.b16 %v1768
    %v1906 = vunpack.c.l.b16 %v1769
    %v1907 = vunpack.c.l.b16 %v1770
    %v1908 = vunpack.c.l.b16 %v1771
    %v1909 = vpack.c.b16 %v1894, %v1893
    %v1910 = vpack.c.b16 %v1896, %v1895
    %v1911 = vpack.c.b16 %v1898, %v1897
    %v1912 = vpack.c.b16 %v1900, %v1899
    %v1913 = vpack.c.b16 %v1902, %v1901
    %v1914 = vpack.c.b16 %v1904, %v1903
    %v1915 = vpack.c.b16 %v1906, %v1905
    %v1916 = vpack.c.b16 %v1908, %v1907
    %1925 = vmatprep.subr.bf16.mxu0 0
    %1926 = vmatpush1.bf16.msra.mxu0 %v1772
    %1927 = vmatprep.subr.bf16.mxu0 0
    %1928 = vmatpush1.bf16.msra.mxu0 %v1773
    %1929 = vmatprep.subr.bf16.mxu0 0
    %1930 = vmatpush1.bf16.msra.mxu0 %v1774
    %1931 = vmatprep.subr.bf16.mxu0 0
    %1932 = vmatpush1.bf16.msra.mxu0 %v1775
    %1933 = vmatprep.subr.bf16.mxu0 0
    %1934 = vmatpush1.bf16.msra.mxu0 %v1776
    %1935 = vmatprep.subr.bf16.mxu0 0
    %1936 = vmatpush1.bf16.msra.mxu0 %v1777
    %1937 = vmatprep.subr.bf16.mxu0 0
    %1938 = vmatpush1.bf16.msra.mxu0 %v1778
    %1939 = vmatprep.subr.bf16.mxu0 0
    %1940 = vmatpush1.bf16.msra.mxu0 %v1779
    %1941 = vmatprep.subr.bf16.mxu0 0
    %1942 = vmatpush1.bf16.msra.mxu0 0
    %1943 = vmatprep.subr.bf16.mxu0 0
    %1944 = vmatpush1.bf16.msra.mxu0 0
    %1945 = vmatprep.subr.bf16.mxu0 0
    %1946 = vmatpush1.bf16.msra.mxu0 0
    %1947 = vmatprep.subr.bf16.mxu0 0
    %1948 = vmatpush1.bf16.msra.mxu0 0
    %1949 = vmatprep.subr.bf16.mxu0 0
    %1950 = vmatpush1.bf16.msra.mxu0 0
    %1951 = vmatprep.subr.bf16.mxu0 0
    %1952 = vmatpush1.bf16.msra.mxu0 0
    %1953 = vmatprep.subr.bf16.mxu0 0
    %1954 = vmatpush1.bf16.msra.mxu0 0
    %1955 = vmatprep.subr.bf16.mxu0 0
    %1956 = vmatpush1.bf16.msra.mxu0 0
    %1957 = vmatprep.mubr.bf16.mxu0 0
    %1958 = vmatmul.mubr.bf16.gmra.mrb[0].mxu0 %v1909
    %v1959 = vpop.f32.mrb[0].mxu0
    %v1960 = vadd.f32 %v1800, %v1959
    %v1961 = vpop.f32.mrb[0].mxu0
    %v1962 = vpop.f32.mrb[0].mxu0
    %v1963 = vadd.f32 %v1805, %v1962
    %v1964 = vpop.f32.mrb[0].mxu0
    %1965 = vmatprep.mubr.bf16.mxu0 0
    %1966 = vmatmul.mubr.bf16.gmra.mrb[0].mxu0 %v1910
    %v1967 = vpop.f32.mrb[0].mxu0
    %v1968 = vadd.f32 %v1810, %v1967
    %v1969 = vpop.f32.mrb[0].mxu0
    %v1970 = vpop.f32.mrb[0].mxu0
    %v1971 = vadd.f32 %v1815, %v1970
    %v1972 = vpop.f32.mrb[0].mxu0
    %1973 = vmatprep.mubr.bf16.mxu0 0
    %1974 = vmatmul.mubr.bf16.gmra.mrb[0].mxu0 %v1911
    %v1975 = vpop.f32.mrb[0].mxu0
    %v1976 = vadd.f32 %v1820, %v1975
    %v1977 = vpop.f32.mrb[0].mxu0
    %v1978 = vpop.f32.mrb[0].mxu0
    %v1979 = vadd.f32 %v1825, %v1978
    %v1980 = vpop.f32.mrb[0].mxu0
    %1981 = vmatprep.mubr.bf16.mxu0 0
    %1982 = vmatmul.mubr.bf16.gmra.mrb[0].mxu0 %v1912
    %v1983 = vpop.f32.mrb[0].mxu0
    %v1984 = vadd.f32 %v1830, %v1983
    %v1985 = vpop.f32.mrb[0].mxu0
    %v1986 = vpop.f32.mrb[0].mxu0
    %v1987 = vadd.f32 %v1835, %v1986
    %v1988 = vpop.f32.mrb[0].mxu0
    %1989 = vmatprep.mubr.bf16.mxu0 0
    %1990 = vmatmul.mubr.bf16.gmra.mrb[0].mxu0 %v1913
    %v1991 = vpop.f32.mrb[0].mxu0
    %v1992 = vadd.f32 %v1840, %v1991
    %v1993 = vpop.f32.mrb[0].mxu0
    %v1994 = vpop.f32.mrb[0].mxu0
    %v1995 = vadd.f32 %v1845, %v1994
    %v1996 = vpop.f32.mrb[0].mxu0
    %1997 = vmatprep.mubr.bf16.mxu0 0
    %1998 = vmatmul.mubr.bf16.gmra.mrb[0].mxu0 %v1914
    %v1999 = vpop.f32.mrb[0].mxu0
    %v2000 = vadd.f32 %v1850, %v1999
    %v2001 = vpop.f32.mrb[0].mxu0
    %v2002 = vpop.f32.mrb[0].mxu0
    %v2003 = vadd.f32 %v1855, %v2002
    %v2004 = vpop.f32.mrb[0].mxu0
    %2005 = vmatprep.mubr.bf16.mxu0 0
    %2006 = vmatmul.mubr.bf16.gmra.mrb[0].mxu0 %v1915
    %v2007 = vpop.f32.mrb[0].mxu0
    %v2008 = vadd.f32 %v1860, %v2007
    %v2009 = vpop.f32.mrb[0].mxu0
    %v2010 = vpop.f32.mrb[0].mxu0
    %v2011 = vadd.f32 %v1865, %v2010
    %v2012 = vpop.f32.mrb[0].mxu0
    %2013 = vmatprep.mubr.bf16.mxu0 0
    %2014 = vmatmul.mubr.bf16.gmra.mrb[0].mxu0 %v1916
    %v2015 = vpop.f32.mrb[0].mxu0
    %v2016 = vadd.f32 %v1870, %v2015
    %v2017 = vpop.f32.mrb[0].mxu0
    %v2018 = vpop.f32.mrb[0].mxu0
    %v2019 = vadd.f32 %v1875, %v2018
    %v2020 = vpop.f32.mrb[0].mxu0
    %2021 = vdwg.mxu0
    %v2022 = vadd.f32 %v1456, %v1960
    %v2023 = vadd.f32 %v1457, %v1963
    %v2024 = vadd.f32 %v1458, %v1968
    %v2025 = vadd.f32 %v1459, %v1971
    %v2026 = vadd.f32 %v1460, %v1976
    %v2027 = vadd.f32 %v1461, %v1979
    %v2028 = vadd.f32 %v1462, %v1984
    %v2029 = vadd.f32 %v1463, %v1987
    %v2030 = vadd.f32 %v1464, %v1992
    %v2031 = vadd.f32 %v1465, %v1995
    %v2032 = vadd.f32 %v1466, %v2000
    %v2033 = vadd.f32 %v1467, %v2003
    %v2034 = vadd.f32 %v1468, %v2008
    %v2035 = vadd.f32 %v1469, %v2011
    %v2036 = vadd.f32 %v1470, %v2016
    %v2037 = vadd.f32 %v1471, %v2019
    %v2038 = vmax.f32 %v2022, 0.0
    %v2039 = vmax.f32 %v2023, 0.0
    %v2040 = vmax.f32 %v2024, 0.0
    %v2041 = vmax.f32 %v2025, 0.0
    %v2042 = vmax.f32 %v2026, 0.0
    %v2043 = vmax.f32 %v2027, 0.0
    %v2044 = vmax.f32 %v2028, 0.0
    %v2045 = vmax.f32 %v2029, 0.0
    %v2046 = vmax.f32 %v2030, 0.0
    %v2047 = vmax.f32 %v2031, 0.0
    %v2048 = vmax.f32 %v2032, 0.0
    %v2049 = vmax.f32 %v2033, 0.0
    %v2050 = vmax.f32 %v2034, 0.0
    %v2051 = vmax.f32 %v2035, 0.0
    %v2052 = vmax.f32 %v2036, 0.0
    %v2053 = vmax.f32 %v2037, 0.0
    %v2054 = vld [vmem:[%s4] sm:$0xff]
    %v2055 = vld [vmem:[%s4 + $0x8] sm:$0xff]
    %v2056 = vld [vmem:[%s4 + $0x10] sm:$0xff]
    %v2057 = vld [vmem:[%s4 + $0x18] sm:$0xff]
    %v2058 = vld [vmem:[%s4 + $0x20] sm:$0xff]
    %v2059 = vld [vmem:[%s4 + $0x28] sm:$0xff]
    %v2060 = vld [vmem:[%s4 + $0x30] sm:$0xff]
    %v2061 = vld [vmem:[%s4 + $0x38] sm:$0xff]
    %v2062 = vld [vmem:[%s4 + $0x40] sm:$0xff]
    %v2063 = vld [vmem:[%s4 + $0x48] sm:$0xff]
    %v2064 = vld [vmem:[%s4 + $0x50] sm:$0xff]
    %v2065 = vld [vmem:[%s4 + $0x58] sm:$0xff]
    %v2066 = vld [vmem:[%s4 + $0x60] sm:$0xff]
    %v2067 = vld [vmem:[%s4 + $0x68] sm:$0xff]
    %v2068 = vld [vmem:[%s4 + $0x70] sm:$0xff]
    %v2069 = vld [vmem:[%s4 + $0x78] sm:$0xff]
    %2071 = vset.pattern.permute.xlu0 0
    %2072 = vperm.xlu0 %2071, %v2054
    %v2073 = vpop.permute.xlu0 %2072
    %2076 = vset.pattern.permute.xlu0 0
    %2077 = vperm.xlu0 %2076, %v2055
    %v2078 = vpop.permute.xlu0 %2077
    %2081 = vset.pattern.permute.xlu0 0
    %2082 = vperm.xlu0 %2081, %v2056
    %v2083 = vpop.permute.xlu0 %2082
    %2086 = vset.pattern.permute.xlu0 0
    %2087 = vperm.xlu0 %2086, %v2057
    %v2088 = vpop.permute.xlu0 %2087
    %2091 = vset.pattern.permute.xlu0 0
    %2092 = vperm.xlu0 %2091, %v2058
    %v2093 = vpop.permute.xlu0 %2092
    %2096 = vset.pattern.permute.xlu0 0
    %2097 = vperm.xlu0 %2096, %v2059
    %v2098 = vpop.permute.xlu0 %2097
    %2101 = vset.pattern.permute.xlu0 0
    %2102 = vperm.xlu0 %2101, %v2060
    %v2103 = vpop.permute.xlu0 %2102
    %2106 = vset.pattern.permute.xlu0 0
    %2107 = vperm.xlu0 %2106, %v2061
    %v2108 = vpop.permute.xlu0 %2107
    %2111 = vset.pattern.permute.xlu0 0
    %2112 = vperm.xlu0 %2111, %v2062
    %v2113 = vpop.permute.xlu0 %2112
    %2116 = vset.pattern.permute.xlu0 0
    %2117 = vperm.xlu0 %2116, %v2063
    %v2118 = vpop.permute.xlu0 %2117
    %2121 = vset.pattern.permute.xlu0 0
    %2122 = vperm.xlu0 %2121, %v2064
    %v2123 = vpop.permute.xlu0 %2122
    %2126 = vset.pattern.permute.xlu0 0
    %2127 = vperm.xlu0 %2126, %v2065
    %v2128 = vpop.permute.xlu0 %2127
    %2131 = vset.pattern.permute.xlu0 0
    %2132 = vperm.xlu0 %2131, %v2066
    %v2133 = vpop.permute.xlu0 %2132
    %2136 = vset.pattern.permute.xlu0 0
    %2137 = vperm.xlu0 %2136, %v2067
    %v2138 = vpop.permute.xlu0 %2137
    %2141 = vset.pattern.permute.xlu0 0
    %2142 = vperm.xlu0 %2141, %v2068
    %v2143 = vpop.permute.xlu0 %2142
    %2146 = vset.pattern.permute.xlu0 0
    %2147 = vperm.xlu0 %2146, %v2069
    %v2148 = vpop.permute.xlu0 %2147
    %v2150 = vmul.f32 %v2038, %v2073
    %v2151 = vmul.f32 %v2039, %v2078
    %v2152 = vmul.f32 %v2040, %v2083
    %v2153 = vmul.f32 %v2041, %v2088
    %v2154 = vmul.f32 %v2042, %v2093
    %v2155 = vmul.f32 %v2043, %v2098
    %v2156 = vmul.f32 %v2044, %v2103
    %v2157 = vmul.f32 %v2045, %v2108
    %v2158 = vmul.f32 %v2046, %v2113
    %v2159 = vmul.f32 %v2047, %v2118
    %v2160 = vmul.f32 %v2048, %v2123
    %v2161 = vmul.f32 %v2049, %v2128
    %v2162 = vmul.f32 %v2050, %v2133
    %v2163 = vmul.f32 %v2051, %v2138
    %v2164 = vmul.f32 %v2052, %v2143
    %v2165 = vmul.f32 %v2053, %v2148
    %v2166 = vadd.f32 %v2150, %v2151
    %v2167 = vadd.f32 %v2166, %v2152
    %v2168 = vadd.f32 %v2167, %v2153
    %v2169 = vadd.f32 %v2168, %v2154
    %v2170 = vadd.f32 %v2169, %v2155
    %v2171 = vadd.f32 %v2170, %v2156
    %v2172 = vadd.f32 %v2171, %v2157
    %v2173 = vadd.f32 %v2172, %v2158
    %v2174 = vadd.f32 %v2173, %v2159
    %v2175 = vadd.f32 %v2174, %v2160
    %v2176 = vadd.f32 %v2175, %v2161
    %v2177 = vadd.f32 %v2176, %v2162
    %v2178 = vadd.f32 %v2177, %v2163
    %v2179 = vadd.f32 %v2178, %v2164
    %v2180 = vadd.f32 %v2179, %v2165
    %v2181 = vrot.slane %v2180, 4
    %v2182 = vadd.f32 %v2180, %v2181
    %v2183 = vrot.slane %v2182, 2
    %v2184 = vadd.f32 %v2182, %v2183
    %v2185 = vrot.slane %v2184, 1
    %v2186 = vadd.f32 %v2184, %v2185
    %v2187 = vld [vmem:[#allocation2] sm:$0x1]
    %2189 = vset.pattern.permute.xlu0 0
    %2190 = vperm.xlu0 %2189, %v2187
    %v2191 = vpop.permute.xlu0 %2190
    %v2193 = vlaneseq
    %v2194 = vshrl.u32 %v2193, 7
    %v2195 = vsub.s32 0, %v2194
    %v2196 = vrot.slane %v2191, %v2195
    %v2197 = vadd.f32 %v2186, %v2196
    %2198 = vst [vmem:[#allocation3] sm:$0x1] %v2197
    // Predicated region
    $region26: #{tpu_custom_call.1} parent=1 // pred_check
      _
    $region27: #{tpu_custom_call.1} parent=1 // pred_check_branch
      %2200 = sbr.rel (0) target = $region29
    $region28: #{tpu_custom_call.1} parent=1 // pred_region
      %s2202 = ssub.s32 16, 16
      %2203 = vsyncadd [#allocation4], %s2202
      %s2205 = sshll.u32 [#allocation3], 4
      %s2206 = int_to_ptr.vmem [resolvable:$true] %s2205
      %2208 = dma.vmem_to_hbm [thread:$0]  %s2206, 16, %s6, [#allocation4]
    $region29: #{tpu_custom_call.1} parent=1 // pred_fallthru
      _
    // Predicated region
    $region30: #{tpu_custom_call.1} parent=1 // pred_check
      _
    $region31: #{tpu_custom_call.1} parent=1 // pred_check_branch
      %2210 = sbr.rel (0) target = $region33
    $region32: #{tpu_custom_call.1} parent=1 // pred_region
      %2211 = dma.done [#allocation4], 16
    $region33: #{tpu_custom_call.1} parent=1 // pred_fallthru
      _
    %2212 = vsyncpa [#allocation4], 1

</llo_original>
